<compile_context>
chip_gen: v6e
topology: v6e:2x2x1
jax: 0.10.0
libtpu: 0.0.40
codegen_flags: <defaults>
</compile_context>

<pallas_src>
from functools import partial, lru_cache

import numpy as np
import jax
import jax.numpy as jnp
from jax.experimental import pallas as pl
from jax.experimental.pallas import tpu as pltpu

LRELU_SLOPE = 0.2


def _weight_norm(w, g):
    # ca_code Conv2dWN / Conv2dWNUB: whole-tensor L2 norm, per-output-channel gain.
    return w * (g[:, None, None, None] / jnp.sqrt(jnp.sum(w * w)))


# ----------------------- Pallas kernel (per grid step) -----------------------
def upconv_kernel(x_ref, t_ref, w1_ref, b1_ref, wr_ref, br_ref, out_ref, *, P, slope):
    x = x_ref[0]                                             # (R_in, Pin)

    # ONE fused matmul: bilinear upsample + zero-padded 3x3 shifts for all nine taps.
    # Result columns [t*P:(t+1)*P] hold tap t; slices are 128-lane aligned (free).
    y = jnp.dot(x, t_ref[...], preferred_element_type=jnp.float32)   # (R_in, 9*P)

    # 3x3 weight-norm conv: accumulate per tap directly in vregs (no im2col scratch),
    # starting from the untied bias.  Everything stays (R_out, 256): lane-dense.
    acc = b1_ref[...]                                        # (R_out, P) f32
    for t in range(9):
        tap = y[:, t * P:(t + 1) * P]                        # (R_in, P)
        acc = acc + jnp.dot(w1_ref[t], tap, preferred_element_type=jnp.float32)
    h = jnp.where(acc >= 0, acc, slope * acc)                # LeakyReLU, f32

    # 1x1 weight-norm skip conv on the centre tap (== bilinearly upsampled input).
    x_up = y[:, 4 * P:5 * P]
    skip = jnp.dot(wr_ref[...], x_up, preferred_element_type=jnp.float32) + br_ref[...]

    out_ref[0] = (h + skip).astype(out_ref.dtype)


# ------------------------ operator construction (glue) -----------------------
def _interp_matrix(n_out, n_in):
    """(n_out, n_in) bilinear interpolation matrix, align_corners=True."""
    if n_out == 1:
        src = np.zeros((1,), np.float64)
    else:
        src = np.arange(n_out, dtype=np.float64) * (n_in - 1) / (n_out - 1)
    lo = np.clip(np.floor(src).astype(np.int64), 0, n_in - 1)
    hi = np.minimum(lo + 1, n_in - 1)
    w_hi = src - lo
    M = np.zeros((n_out, n_in), np.float64)
    M[np.arange(n_out), lo] += 1.0 - w_hi
    M[np.arange(n_out), hi] += w_hi
    return M


@lru_cache(maxsize=None)
def _tap_operator_lanes(S, Hin, Win):
    """(Hin*Win, 9*S*S) f32.  Column block t = kh*3+kw is the
    (shift ∘ zero-pad ∘ bilinear-upsample, align_corners=True) operator for 3x3 tap t,
    so x(C, Hin*Win) @ t_all yields all nine taps lane-stacked."""
    Uh = _interp_matrix(S, Hin)                   # (S, Hin)
    Uw = _interp_matrix(S, Win)                   # (S, Win)
    ops = []
    for kh in range(3):
        for kw in range(3):
            Sh = np.eye(S, k=kh - 1)              # shift + zero-pad along H
            Sw = np.eye(S, k=kw - 1)              # shift + zero-pad along W
            ops.append(np.kron(Sh @ Uh, Sw @ Uw).T)   # (Hin*Win, S*S)
    return np.concatenate(ops, axis=1).astype(np.float32)    # (Hin*Win, 9*S*S)


def _batch_per_step(B):
    """v7x (2 TensorCores/chip): one batch element per grid step so the 'parallel'
    grid axis shards across cores.  v5e/v6e (single core): collapse the batch into
    one grid step to avoid the ~0.35 us per-step overhead."""
    kind = ""
    try:
        kind = jax.devices()[0].device_kind.lower()
    except Exception:
        pass
    return 1 if "v7" in kind else B


# --------------------------------- wrapper -----------------------------------
@partial(jax.jit, static_argnames=("size", "lrelu_slope", "use_bf16", "batch_per_step"))
def upconv_block_pallas(x, params, *, size, lrelu_slope=LRELU_SLOPE,
                        use_bf16=True, batch_per_step=None):
    B, Cin, Hin, Win = x.shape
    Cout = params["w1"].shape[0]
    S = size
    P, Pin = S * S, Hin * Win

    bps = _batch_per_step(B) if batch_per_step is None else batch_per_step
    bps = max(1, min(int(bps), B))
    assert B % bps == 0, (B, bps)
    steps = B // bps
    R_in, R_out = bps * Cin, bps * Cout

    # --- parameter prep (constant-folds under jit) ---
    w1_eff = _weight_norm(params["w1"], params["g1"])               # (Cout, Cin, 3, 3)
    wr_eff = _weight_norm(params["wr"], params["gr"])[:, :, 0, 0]   # (Cout, Cin)
    w1_taps = jnp.transpose(w1_eff, (2, 3, 0, 1)).reshape(9, Cout, Cin)  # [t, o, c]

    if bps > 1:
        # Block-diagonalise across the batch elements handled in one grid step.
        eye = jnp.eye(bps, dtype=w1_taps.dtype)
        w1_taps = jnp.einsum("ij,toc->tiojc", eye, w1_taps).reshape(9, R_out, R_in)
        wr_eff = jnp.einsum("ij,oc->iojc", eye, wr_eff).reshape(R_out, R_in)

    w1_k = w1_taps.astype(jnp.float32)                              # (9, R_out, R_in)
    wr_k = wr_eff.astype(jnp.float32)                               # (R_out, R_in)
    b1_k = jnp.tile(params["b1"].reshape(Cout, P), (bps, 1)).astype(jnp.float32)
    br_k = jnp.tile(params["br"].reshape(Cout, 1), (bps, 1)).astype(jnp.float32)

    # bf16 on the MXU operands that dominate HBM traffic; f32 epilogue stays f32.
    op_dtype = jnp.bfloat16 if use_bf16 else jnp.float32
    t_all = jnp.asarray(_tap_operator_lanes(S, Hin, Win), dtype=op_dtype)  # (Pin, 9*P)
    x_steps = x.reshape(steps, R_in, Pin).astype(op_dtype)

    kern = partial(upconv_kernel, P=P, slope=lrelu_slope)

    y = pl.pallas_call(
        kern,
        out_shape=jax.ShapeDtypeStruct((steps, R_out, P), jnp.float32),
        grid_spec=pltpu.PrefetchScalarGridSpec(
            num_scalar_prefetch=0,
            grid=(steps,),
            in_specs=[
                pl.BlockSpec((1, R_in, Pin), lambda i: (i, 0, 0)),    # input rows
                pl.BlockSpec((Pin, 9 * P), lambda i: (0, 0)),         # tap operators
                pl.BlockSpec((9, R_out, R_in), lambda i: (0, 0, 0)),  # per-tap 3x3 weights
                pl.BlockSpec((R_out, P), lambda i: (0, 0)),           # untied bias
                pl.BlockSpec((R_out, R_in), lambda i: (0, 0)),        # 1x1 skip weights
                pl.BlockSpec((R_out, 1), lambda i: (0, 0)),           # skip bias
            ],
            out_specs=pl.BlockSpec((1, R_out, P), lambda i: (i, 0, 0)),  # lane-dense
        ),
        compiler_params=pltpu.CompilerParams(
            dimension_semantics=("parallel",)),
    )(x_steps, t_all, w1_k, b1_k, wr_k, br_k)

    return y.reshape(B, Cout, S, S)


# -------------------- pure-JAX reference for verification --------------------
def _upsample_bilinear_align_corners(x, size):
    B, C, H, W = x.shape

    def coords(n_in, n_out):
        i = jnp.arange(n_out, dtype=jnp.float32)
        src = jnp.zeros((n_out,), jnp.float32) if n_out == 1 else i * (n_in - 1) / (n_out - 1)
        lo = jnp.clip(jnp.floor(src).astype(jnp.int32), 0, n_in - 1)
        hi = jnp.minimum(lo + 1, n_in - 1)
        frac = src - lo.astype(jnp.float32)
        return lo, hi, frac

    h0, h1, fh = coords(H, size)
    w0, w1, fw = coords(W, size)
    rows = (x[:, :, h0, :] * (1.0 - fh)[None, None, :, None]
            + x[:, :, h1, :] * fh[None, None, :, None])
    out = (rows[:, :, :, w0] * (1.0 - fw)[None, None, None, :]
           + rows[:, :, :, w1] * fw[None, None, None, :])
    return out


def _conv_wn_ref(x, w, g, padding):
    w_eff = _weight_norm(w, g)
    return jax.lax.conv_general_dilated(
        x, w_eff, window_strides=(1, 1),
        padding=[(padding, padding), (padding, padding)],
        dimension_numbers=("NCHW", "OIHW", "NCHW"))


def upconv_block_ref(x, params, *, size, lrelu_slope=LRELU_SLOPE):
    x_up = _upsample_bilinear_align_corners(x, size)
    x_skip = _conv_wn_ref(x_up, params["wr"], params["gr"], 0) \
        + params["br"][None, :, None, None]
    h = _conv_wn_ref(x_up, params["w1"], params["g1"], 1) + params["b1"][None]
    h = jnp.where(h >= 0, h, lrelu_slope * h)
    return h + x_skip


# --------------------------------- main --------------------------------------
if __name__ == "__main__":
    B, Cin, Cout = 2, 4, 8
    Hin = Win = 8
    size = 16

    key = jax.random.PRNGKey(0)
    ks = jax.random.split(key, 7)
    params = {
        "w1": 0.1 * jax.random.normal(ks[0], (Cout, Cin, 3, 3), jnp.float32),
        "g1": 1.0 + 0.1 * jax.random.normal(ks[1], (Cout,), jnp.float32),
        "b1": 0.01 * jax.random.normal(ks[2], (Cout, size, size), jnp.float32),
        "wr": 0.1 * jax.random.normal(ks[3], (Cout, Cin, 1, 1), jnp.float32),
        "gr": 1.0 + 0.1 * jax.random.normal(ks[4], (Cout,), jnp.float32),
        "br": 0.01 * jax.random.normal(ks[5], (Cout,), jnp.float32),
    }
    x = jax.random.normal(ks[6], (B, Cin, Hin, Win), jnp.float32)

    ref = jax.block_until_ready(upconv_block_ref(x, params, size=size))

    # 1) exact-structure check with f32 MXU operands (tight tolerance).
    out_f32 = jax.block_until_ready(
        upconv_block_pallas(x, params, size=size, use_bf16=False))
    assert out_f32.shape == (B, Cout, size, size), out_f32.shape
    err_f32 = float(jnp.max(jnp.abs(out_f32 - ref)))
    assert jnp.allclose(out_f32, ref, atol=1e-3, rtol=1e-3), err_f32

    # 2) production path: bf16 tap-operator/input (halved dominant DMA), f32 epilogue.
    out = jax.block_until_ready(
        upconv_block_pallas(x, params, size=size, use_bf16=True))
    assert out.shape == (B, Cout, size, size), out.shape
    err_bf16 = float(jnp.max(jnp.abs(out - ref)))
    assert jnp.allclose(out, ref, atol=4e-2, rtol=4e-2), err_bf16

    print("KERNEL_OK")
</pallas_src>

<mosaic_0001>
module attributes {stable_mosaic.version = 11 : i64} {
  func.func @upconv_kernel(%arg0: i32, %arg1: memref<1x8x64xf32, #tpu.memory_space<vmem>>, %arg2: memref<64x2304xf32, #tpu.memory_space<vmem>>, %arg3: memref<9x16x8xf32, #tpu.memory_space<vmem>>, %arg4: memref<16x256xf32, #tpu.memory_space<vmem>>, %arg5: memref<16x8xf32, #tpu.memory_space<vmem>>, %arg6: memref<16x1xf32, #tpu.memory_space<vmem>>, %arg7: memref<1x16x256xf32, #tpu.memory_space<vmem>>) attributes {dimension_semantics = [#tpu.dimension_semantics<parallel>], iteration_bounds = array<i64: 1>, scalar_prefetch = 0 : i64, scratch_operands = 0 : i64, tpu.core_type = #tpu.core_type<tc>, window_params = [{transform_indices = @transform_0, window_bounds = array<i64: 1, 8, 64>}, {pipeline_mode = #tpu.pipeline_mode<synchronous>, transform_indices = @transform_1, window_bounds = array<i64: 64, 2304>}, {pipeline_mode = #tpu.pipeline_mode<synchronous>, transform_indices = @transform_2, window_bounds = array<i64: 9, 16, 8>}, {pipeline_mode = #tpu.pipeline_mode<synchronous>, transform_indices = @transform_3, window_bounds = array<i64: 16, 256>}, {pipeline_mode = #tpu.pipeline_mode<synchronous>, transform_indices = @transform_4, window_bounds = array<i64: 16, 8>}, {pipeline_mode = #tpu.pipeline_mode<synchronous>, transform_indices = @transform_5, window_bounds = array<i64: 16, 1>}, {transform_indices = @transform_6, window_bounds = array<i64: 1, 16, 256>}]} {
    %c0 = arith.constant 0 : index
    %c0_0 = arith.constant 0 : index
    %c0_1 = arith.constant 0 : index
    %0 = vector.load %arg1[%c0, %c0_0, %c0_1] : memref<1x8x64xf32, #tpu.memory_space<vmem>>, vector<1x8x64xf32>
    %1 = vector.shape_cast %0 : vector<1x8x64xf32> to vector<8x64xf32>
    %c0_2 = arith.constant 0 : index
    %c0_3 = arith.constant 0 : index
    %2 = vector.load %arg2[%c0_2, %c0_3] : memref<64x2304xf32, #tpu.memory_space<vmem>>, vector<64x2304xf32>
    %cst = arith.constant dense<0.000000e+00> : vector<8x2304xf32>
    %3 = tpu.matmul %1, %2, %cst {dimension_numbers = #tpu.dot_dimension_numbers<[1], [0], [0], [1], [0, 0, 1, 1], [], []>} : vector<8x64xf32>, vector<64x2304xf32>, vector<8x2304xf32> -> vector<8x2304xf32>
    %c0_4 = arith.constant 0 : index
    %c0_5 = arith.constant 0 : index
    %4 = vector.load %arg4[%c0_4, %c0_5] : memref<16x256xf32, #tpu.memory_space<vmem>>, vector<16x256xf32>
    %5 = vector.extract_strided_slice %3 {offsets = [0, 0], sizes = [8, 256], strides = [1, 1]} : vector<8x2304xf32> to vector<8x256xf32>
    %c0_6 = arith.constant 0 : index
    %c0_7 = arith.constant 0 : index
    %c0_8 = arith.constant 0 : index
    %6 = vector.load %arg3[%c0_6, %c0_7, %c0_8] : memref<9x16x8xf32, #tpu.memory_space<vmem>>, vector<1x16x8xf32>
    %7 = vector.shape_cast %6 : vector<1x16x8xf32> to vector<16x8xf32>
    %cst_9 = arith.constant dense<0.000000e+00> : vector<16x256xf32>
    %8 = tpu.matmul %7, %5, %cst_9 {dimension_numbers = #tpu.dot_dimension_numbers<[1], [0], [0], [1], [0, 0, 1, 1], [], []>} : vector<16x8xf32>, vector<8x256xf32>, vector<16x256xf32> -> vector<16x256xf32>
    %9 = arith.addf %4, %8 : vector<16x256xf32>
    %10 = vector.extract_strided_slice %3 {offsets = [0, 256], sizes = [8, 256], strides = [1, 1]} : vector<8x2304xf32> to vector<8x256xf32>
    %c1 = arith.constant 1 : index
    %c0_10 = arith.constant 0 : index
    %c0_11 = arith.constant 0 : index
    %11 = vector.load %arg3[%c1, %c0_10, %c0_11] : memref<9x16x8xf32, #tpu.memory_space<vmem>>, vector<1x16x8xf32>
    %12 = vector.shape_cast %11 : vector<1x16x8xf32> to vector<16x8xf32>
    %cst_12 = arith.constant dense<0.000000e+00> : vector<16x256xf32>
    %13 = tpu.matmul %12, %10, %cst_12 {dimension_numbers = #tpu.dot_dimension_numbers<[1], [0], [0], [1], [0, 0, 1, 1], [], []>} : vector<16x8xf32>, vector<8x256xf32>, vector<16x256xf32> -> vector<16x256xf32>
    %14 = arith.addf %9, %13 : vector<16x256xf32>
    %15 = vector.extract_strided_slice %3 {offsets = [0, 512], sizes = [8, 256], strides = [1, 1]} : vector<8x2304xf32> to vector<8x256xf32>
    %c2 = arith.constant 2 : index
    %c0_13 = arith.constant 0 : index
    %c0_14 = arith.constant 0 : index
    %16 = vector.load %arg3[%c2, %c0_13, %c0_14] : memref<9x16x8xf32, #tpu.memory_space<vmem>>, vector<1x16x8xf32>
    %17 = vector.shape_cast %16 : vector<1x16x8xf32> to vector<16x8xf32>
    %cst_15 = arith.constant dense<0.000000e+00> : vector<16x256xf32>
    %18 = tpu.matmul %17, %15, %cst_15 {dimension_numbers = #tpu.dot_dimension_numbers<[1], [0], [0], [1], [0, 0, 1, 1], [], []>} : vector<16x8xf32>, vector<8x256xf32>, vector<16x256xf32> -> vector<16x256xf32>
    %19 = arith.addf %14, %18 : vector<16x256xf32>
    %20 = vector.extract_strided_slice %3 {offsets = [0, 768], sizes = [8, 256], strides = [1, 1]} : vector<8x2304xf32> to vector<8x256xf32>
    %c3 = arith.constant 3 : index
    %c0_16 = arith.constant 0 : index
    %c0_17 = arith.constant 0 : index
    %21 = vector.load %arg3[%c3, %c0_16, %c0_17] : memref<9x16x8xf32, #tpu.memory_space<vmem>>, vector<1x16x8xf32>
    %22 = vector.shape_cast %21 : vector<1x16x8xf32> to vector<16x8xf32>
    %cst_18 = arith.constant dense<0.000000e+00> : vector<16x256xf32>
    %23 = tpu.matmul %22, %20, %cst_18 {dimension_numbers = #tpu.dot_dimension_numbers<[1], [0], [0], [1], [0, 0, 1, 1], [], []>} : vector<16x8xf32>, vector<8x256xf32>, vector<16x256xf32> -> vector<16x256xf32>
    %24 = arith.addf %19, %23 : vector<16x256xf32>
    %25 = vector.extract_strided_slice %3 {offsets = [0, 1024], sizes = [8, 256], strides = [1, 1]} : vector<8x2304xf32> to vector<8x256xf32>
    %c4 = arith.constant 4 : index
    %c0_19 = arith.constant 0 : index
    %c0_20 = arith.constant 0 : index
    %26 = vector.load %arg3[%c4, %c0_19, %c0_20] : memref<9x16x8xf32, #tpu.memory_space<vmem>>, vector<1x16x8xf32>
    %27 = vector.shape_cast %26 : vector<1x16x8xf32> to vector<16x8xf32>
    %cst_21 = arith.constant dense<0.000000e+00> : vector<16x256xf32>
    %28 = tpu.matmul %27, %25, %cst_21 {dimension_numbers = #tpu.dot_dimension_numbers<[1], [0], [0], [1], [0, 0, 1, 1], [], []>} : vector<16x8xf32>, vector<8x256xf32>, vector<16x256xf32> -> vector<16x256xf32>
    %29 = arith.addf %24, %28 : vector<16x256xf32>
    %30 = vector.extract_strided_slice %3 {offsets = [0, 1280], sizes = [8, 256], strides = [1, 1]} : vector<8x2304xf32> to vector<8x256xf32>
    %c5 = arith.constant 5 : index
    %c0_22 = arith.constant 0 : index
    %c0_23 = arith.constant 0 : index
    %31 = vector.load %arg3[%c5, %c0_22, %c0_23] : memref<9x16x8xf32, #tpu.memory_space<vmem>>, vector<1x16x8xf32>
    %32 = vector.shape_cast %31 : vector<1x16x8xf32> to vector<16x8xf32>
    %cst_24 = arith.constant dense<0.000000e+00> : vector<16x256xf32>
    %33 = tpu.matmul %32, %30, %cst_24 {dimension_numbers = #tpu.dot_dimension_numbers<[1], [0], [0], [1], [0, 0, 1, 1], [], []>} : vector<16x8xf32>, vector<8x256xf32>, vector<16x256xf32> -> vector<16x256xf32>
    %34 = arith.addf %29, %33 : vector<16x256xf32>
    %35 = vector.extract_strided_slice %3 {offsets = [0, 1536], sizes = [8, 256], strides = [1, 1]} : vector<8x2304xf32> to vector<8x256xf32>
    %c6 = arith.constant 6 : index
    %c0_25 = arith.constant 0 : index
    %c0_26 = arith.constant 0 : index
    %36 = vector.load %arg3[%c6, %c0_25, %c0_26] : memref<9x16x8xf32, #tpu.memory_space<vmem>>, vector<1x16x8xf32>
    %37 = vector.shape_cast %36 : vector<1x16x8xf32> to vector<16x8xf32>
    %cst_27 = arith.constant dense<0.000000e+00> : vector<16x256xf32>
    %38 = tpu.matmul %37, %35, %cst_27 {dimension_numbers = #tpu.dot_dimension_numbers<[1], [0], [0], [1], [0, 0, 1, 1], [], []>} : vector<16x8xf32>, vector<8x256xf32>, vector<16x256xf32> -> vector<16x256xf32>
    %39 = arith.addf %34, %38 : vector<16x256xf32>
    %40 = vector.extract_strided_slice %3 {offsets = [0, 1792], sizes = [8, 256], strides = [1, 1]} : vector<8x2304xf32> to vector<8x256xf32>
    %c7 = arith.constant 7 : index
    %c0_28 = arith.constant 0 : index
    %c0_29 = arith.constant 0 : index
    %41 = vector.load %arg3[%c7, %c0_28, %c0_29] : memref<9x16x8xf32, #tpu.memory_space<vmem>>, vector<1x16x8xf32>
    %42 = vector.shape_cast %41 : vector<1x16x8xf32> to vector<16x8xf32>
    %cst_30 = arith.constant dense<0.000000e+00> : vector<16x256xf32>
    %43 = tpu.matmul %42, %40, %cst_30 {dimension_numbers = #tpu.dot_dimension_numbers<[1], [0], [0], [1], [0, 0, 1, 1], [], []>} : vector<16x8xf32>, vector<8x256xf32>, vector<16x256xf32> -> vector<16x256xf32>
    %44 = arith.addf %39, %43 : vector<16x256xf32>
    %45 = vector.extract_strided_slice %3 {offsets = [0, 2048], sizes = [8, 256], strides = [1, 1]} : vector<8x2304xf32> to vector<8x256xf32>
    %c8 = arith.constant 8 : index
    %c0_31 = arith.constant 0 : index
    %c0_32 = arith.constant 0 : index
    %46 = vector.load %arg3[%c8, %c0_31, %c0_32] : memref<9x16x8xf32, #tpu.memory_space<vmem>>, vector<1x16x8xf32>
    %47 = vector.shape_cast %46 : vector<1x16x8xf32> to vector<16x8xf32>
    %cst_33 = arith.constant dense<0.000000e+00> : vector<16x256xf32>
    %48 = tpu.matmul %47, %45, %cst_33 {dimension_numbers = #tpu.dot_dimension_numbers<[1], [0], [0], [1], [0, 0, 1, 1], [], []>} : vector<16x8xf32>, vector<8x256xf32>, vector<16x256xf32> -> vector<16x256xf32>
    %49 = arith.addf %44, %48 : vector<16x256xf32>
    %cst_34 = arith.constant 0.000000e+00 : f32
    %50 = vector.broadcast %cst_34 : f32 to vector<16x256xf32>
    %51 = arith.cmpf oge, %49, %50 : vector<16x256xf32>
    %cst_35 = arith.constant 2.000000e-01 : f32
    %52 = vector.broadcast %cst_35 : f32 to vector<16x256xf32>
    %53 = arith.mulf %52, %49 : vector<16x256xf32>
    %54 = arith.select %51, %49, %53 : vector<16x256xi1>, vector<16x256xf32>
    %55 = vector.extract_strided_slice %3 {offsets = [0, 1024], sizes = [8, 256], strides = [1, 1]} : vector<8x2304xf32> to vector<8x256xf32>
    %c0_36 = arith.constant 0 : index
    %c0_37 = arith.constant 0 : index
    %56 = vector.load %arg5[%c0_36, %c0_37] : memref<16x8xf32, #tpu.memory_space<vmem>>, vector<16x8xf32>
    %cst_38 = arith.constant dense<0.000000e+00> : vector<16x256xf32>
    %57 = tpu.matmul %56, %55, %cst_38 {dimension_numbers = #tpu.dot_dimension_numbers<[1], [0], [0], [1], [0, 0, 1, 1], [], []>} : vector<16x8xf32>, vector<8x256xf32>, vector<16x256xf32> -> vector<16x256xf32>
    %c0_39 = arith.constant 0 : index
    %c0_40 = arith.constant 0 : index
    %58 = vector.load %arg6[%c0_39, %c0_40] : memref<16x1xf32, #tpu.memory_space<vmem>>, vector<16x1xf32>
    %59 = vector.broadcast %58 : vector<16x1xf32> to vector<16x256xf32>
    %60 = arith.addf %57, %59 : vector<16x256xf32>
    %61 = arith.addf %54, %60 : vector<16x256xf32>
    %c0_41 = arith.constant 0 : index
    %c0_42 = arith.constant 0 : index
    %c0_43 = arith.constant 0 : index
    %62 = vector.load %arg7[%c0_41, %c0_42, %c0_43] : memref<1x16x256xf32, #tpu.memory_space<vmem>>, vector<1x16x256xf32>
    %63 = vector.shape_cast %62 : vector<1x16x256xf32> to vector<16x256xf32>
    %64 = vector.shape_cast %61 : vector<16x256xf32> to vector<1x16x256xf32>
    tpu.vector_store %arg7[%c0_41, %c0_42, %c0_43], %64 {strides = array<i32>} : memref<1x16x256xf32, #tpu.memory_space<vmem>>, vector<1x16x256xf32>,
    return
  }
  func.func @transform_0(%arg0: i32) -> (i32, i32, i32) {
    %c0_i32 = arith.constant 0 : i32
    %c0_i32_0 = arith.constant 0 : i32
    %c0_i32_1 = arith.constant 0 : i32
    return %arg0, %c0_i32, %c0_i32_0 : i32, i32, i32
  }
  func.func @transform_1(%arg0: i32) -> (i32, i32) {
    %c0_i32 = arith.constant 0 : i32
    %c0_i32_0 = arith.constant 0 : i32
    %c0_i32_1 = arith.constant 0 : i32
    return %c0_i32, %c0_i32_0 : i32, i32
  }
  func.func @transform_2(%arg0: i32) -> (i32, i32, i32) {
    %c0_i32 = arith.constant 0 : i32
    %c0_i32_0 = arith.constant 0 : i32
    %c0_i32_1 = arith.constant 0 : i32
    %c0_i32_2 = arith.constant 0 : i32
    return %c0_i32, %c0_i32_0, %c0_i32_1 : i32, i32, i32
  }
  func.func @transform_3(%arg0: i32) -> (i32, i32) {
    %c0_i32 = arith.constant 0 : i32
    %c0_i32_0 = arith.constant 0 : i32
    %c0_i32_1 = arith.constant 0 : i32
    return %c0_i32, %c0_i32_0 : i32, i32
  }
  func.func @transform_4(%arg0: i32) -> (i32, i32) {
    %c0_i32 = arith.constant 0 : i32
    %c0_i32_0 = arith.constant 0 : i32
    %c0_i32_1 = arith.constant 0 : i32
    return %c0_i32, %c0_i32_0 : i32, i32
  }
  func.func @transform_5(%arg0: i32) -> (i32, i32) {
    %c0_i32 = arith.constant 0 : i32
    %c0_i32_0 = arith.constant 0 : i32
    %c0_i32_1 = arith.constant 0 : i32
    return %c0_i32, %c0_i32_0 : i32, i32
  }
  func.func @transform_6(%arg0: i32) -> (i32, i32, i32) {
    %c0_i32 = arith.constant 0 : i32
    %c0_i32_0 = arith.constant 0 : i32
    %c0_i32_1 = arith.constant 0 : i32
    return %arg0, %c0_i32, %c0_i32_0 : i32, i32, i32
  }
}

</mosaic_0001>

<llo_original>
// kernel: upconv_block_pallas.1
$region0: #{upconv_block_pallas.1}
  #allocation0 [shape = 'u32[]', space=smem, size = 0x4, offset = 0x4, fixed_abs, tag = 'smem constant byte address 0x4 - core index']
  #allocation1 [shape = 'u32[144,128]{1,0:T(1,128)}', space=vmem, size = 0x12000, scoped, tag = 'internal scratch']
  %s0 = inlined_call_operand.vmem [shape: f32[1,8,64], index: 0, kind: input, shape index: {}]
  %s1 = inlined_call_operand.hbm [shape: f32[64,2304], index: 1, kind: input, shape index: {}]
  %s2 = inlined_call_operand.vmem [shape: f32[9,16,8], index: 2, kind: input, shape index: {}]
  %s3 = inlined_call_operand.vmem [shape: f32[16,256], index: 3, kind: input, shape index: {}]
  %s4 = inlined_call_operand.vmem [shape: f32[16,8], index: 4, kind: input, shape index: {}]
  %s5 = inlined_call_operand.vmem [shape: f32[16,1], index: 5, kind: input, shape index: {}]
  %s6 = inlined_call_operand.vmem [shape: f32[1,16,256], index: 6, kind: output, shape index: {}]
  %s7 = sld [smem:[#allocation0]]
  $region38: #{upconv_block_pallas.1} parent=0
    _
  %s9 = ssub.s32 1, %s7
  %s10 = scalar_select 0, %s9, %s7
  $region1: #{upconv_block_pallas.1} parent=0
    #allocation2 [shape = 'u8[589824]{0}', space=vmem, size = 0x90000, scoped, tag = 'input window, operand 1, single buffered']
    #allocation3 [shape = 's32[1]{0}', space=sflag, size = 0x4, scoped, tag = 'scoped memory for upconv_block_pallas.1']
    %11 = vsyncpa [#allocation3], 0
    // Predicated region
    $region2: #{upconv_block_pallas.1} parent=1 // pred_check
      _
    $region3: #{upconv_block_pallas.1} parent=1 // pred_check_branch
      %13 = sbr.rel (0) target = $region5
    $region4: #{upconv_block_pallas.1} parent=1 // pred_region
      _
    $region5: #{upconv_block_pallas.1} parent=1 // pred_fallthru
      _
    // Predicated region
    $region6: #{upconv_block_pallas.1} parent=1 // pred_check
      _
    $region7: #{upconv_block_pallas.1} parent=1 // pred_check_branch
      %15 = sbr.rel (0) target = $region9
    $region8: #{upconv_block_pallas.1} parent=1 // pred_region
      %s17 = ssub.s32 18432, 18432
      %18 = vsyncadd [#allocation3], %s17
      %s19 = sshll.u32 [#allocation2], 4
      %s20 = int_to_ptr.vmem [resolvable:$true] %s19
      %25 = dma.hbm_to_vmem [thread:$0]  %s1, 18432, %s20, [#allocation3], 2304, 2304, 144
    $region9: #{upconv_block_pallas.1} parent=1 // pred_fallthru
      _
    // Predicated region
    $region10: #{upconv_block_pallas.1} parent=1 // pred_check
      _
    $region11: #{upconv_block_pallas.1} parent=1 // pred_check_branch
      %27 = sbr.rel (0) target = $region13
    $region12: #{upconv_block_pallas.1} parent=1 // pred_region
      _
    $region13: #{upconv_block_pallas.1} parent=1 // pred_fallthru
      _
    // Predicated region
    $region14: #{upconv_block_pallas.1} parent=1 // pred_check
      _
    $region15: #{upconv_block_pallas.1} parent=1 // pred_check_branch
      %29 = sbr.rel (0) target = $region17
    $region16: #{upconv_block_pallas.1} parent=1 // pred_region
      _
    $region17: #{upconv_block_pallas.1} parent=1 // pred_fallthru
      _
    // Predicated region
    $region18: #{upconv_block_pallas.1} parent=1 // pred_check
      _
    $region19: #{upconv_block_pallas.1} parent=1 // pred_check_branch
      %31 = sbr.rel (0) target = $region21
    $region20: #{upconv_block_pallas.1} parent=1 // pred_region
      _
    $region21: #{upconv_block_pallas.1} parent=1 // pred_fallthru
      _
    // Predicated region
    $region22: #{upconv_block_pallas.1} parent=1 // pred_check
      _
    $region23: #{upconv_block_pallas.1} parent=1 // pred_check_branch
      %33 = sbr.rel (0) target = $region25
    $region24: #{upconv_block_pallas.1} parent=1 // pred_region
      _
    $region25: #{upconv_block_pallas.1} parent=1 // pred_fallthru
      _
    // Predicated region
    $region26: #{upconv_block_pallas.1} parent=1 // pred_check
      _
    $region27: #{upconv_block_pallas.1} parent=1 // pred_check_branch
      %35 = sbr.rel (0) target = $region29
    $region28: #{upconv_block_pallas.1} parent=1 // pred_region
      %36 = dma.done [#allocation3], 18432
    $region29: #{upconv_block_pallas.1} parent=1 // pred_fallthru
      _
    %v37 = vld [vmem:[%s0] sm:$0xff]
    %v38 = vld [vmem:[#allocation2] sm:$0xff]
    %v39 = vld [vmem:[#allocation2 + $0x8] sm:$0xff]
    %v40 = vld [vmem:[#allocation2 + $0x10] sm:$0xff]
    %v41 = vld [vmem:[#allocation2 + $0x18] sm:$0xff]
    %v42 = vld [vmem:[#allocation2 + $0x20] sm:$0xff]
    %v43 = vld [vmem:[#allocation2 + $0x28] sm:$0xff]
    %v44 = vld [vmem:[#allocation2 + $0x30] sm:$0xff]
    %v45 = vld [vmem:[#allocation2 + $0x38] sm:$0xff]
    %v46 = vld [vmem:[#allocation2 + $0x40] sm:$0xff]
    %v47 = vld [vmem:[#allocation2 + $0x48] sm:$0xff]
    %v48 = vld [vmem:[#allocation2 + $0x50] sm:$0xff]
    %v49 = vld [vmem:[#allocation2 + $0x58] sm:$0xff]
    %v50 = vld [vmem:[#allocation2 + $0x60] sm:$0xff]
    %v51 = vld [vmem:[#allocation2 + $0x68] sm:$0xff]
    %v52 = vld [vmem:[#allocation2 + $0x70] sm:$0xff]
    %v53 = vld [vmem:[#allocation2 + $0x78] sm:$0xff]
    %v54 = vld [vmem:[#allocation2 + $0x80] sm:$0xff]
    %v55 = vld [vmem:[#allocation2 + $0x88] sm:$0xff]
    %v56 = vld [vmem:[#allocation2 + $0x90] sm:$0xff]
    %v57 = vld [vmem:[#allocation2 + $0x98] sm:$0xff]
    %v58 = vld [vmem:[#allocation2 + $0xa0] sm:$0xff]
    %v59 = vld [vmem:[#allocation2 + $0xa8] sm:$0xff]
    %v60 = vld [vmem:[#allocation2 + $0xb0] sm:$0xff]
    %v61 = vld [vmem:[#allocation2 + $0xb8] sm:$0xff]
    %v62 = vld [vmem:[#allocation2 + $0xc0] sm:$0xff]
    %v63 = vld [vmem:[#allocation2 + $0xc8] sm:$0xff]
    %v64 = vld [vmem:[#allocation2 + $0xd0] sm:$0xff]
    %v65 = vld [vmem:[#allocation2 + $0xd8] sm:$0xff]
    %v66 = vld [vmem:[#allocation2 + $0xe0] sm:$0xff]
    %v67 = vld [vmem:[#allocation2 + $0xe8] sm:$0xff]
    %v68 = vld [vmem:[#allocation2 + $0xf0] sm:$0xff]
    %v69 = vld [vmem:[#allocation2 + $0xf8] sm:$0xff]
    %v70 = vld [vmem:[#allocation2 + $0x100] sm:$0xff]
    %v71 = vld [vmem:[#allocation2 + $0x108] sm:$0xff]
    %v72 = vld [vmem:[#allocation2 + $0x110] sm:$0xff]
    %v73 = vld [vmem:[#allocation2 + $0x118] sm:$0xff]
    %v74 = vld [vmem:[#allocation2 + $0x120] sm:$0xff]
    %v75 = vld [vmem:[#allocation2 + $0x128] sm:$0xff]
    %v76 = vld [vmem:[#allocation2 + $0x130] sm:$0xff]
    %v77 = vld [vmem:[#allocation2 + $0x138] sm:$0xff]
    %v78 = vld [vmem:[#allocation2 + $0x140] sm:$0xff]
    %v79 = vld [vmem:[#allocation2 + $0x148] sm:$0xff]
    %v80 = vld [vmem:[#allocation2 + $0x150] sm:$0xff]
    %v81 = vld [vmem:[#allocation2 + $0x158] sm:$0xff]
    %v82 = vld [vmem:[#allocation2 + $0x160] sm:$0xff]
    %v83 = vld [vmem:[#allocation2 + $0x168] sm:$0xff]
    %v84 = vld [vmem:[#allocation2 + $0x170] sm:$0xff]
    %v85 = vld [vmem:[#allocation2 + $0x178] sm:$0xff]
    %v86 = vld [vmem:[#allocation2 + $0x180] sm:$0xff]
    %v87 = vld [vmem:[#allocation2 + $0x188] sm:$0xff]
    %v88 = vld [vmem:[#allocation2 + $0x190] sm:$0xff]
    %v89 = vld [vmem:[#allocation2 + $0x198] sm:$0xff]
    %v90 = vld [vmem:[#allocation2 + $0x1a0] sm:$0xff]
    %v91 = vld [vmem:[#allocation2 + $0x1a8] sm:$0xff]
    %v92 = vld [vmem:[#allocation2 + $0x1b0] sm:$0xff]
    %v93 = vld [vmem:[#allocation2 + $0x1b8] sm:$0xff]
    %v94 = vld [vmem:[#allocation2 + $0x1c0] sm:$0xff]
    %v95 = vld [vmem:[#allocation2 + $0x1c8] sm:$0xff]
    %v96 = vld [vmem:[#allocation2 + $0x1d0] sm:$0xff]
    %v97 = vld [vmem:[#allocation2 + $0x1d8] sm:$0xff]
    %v98 = vld [vmem:[#allocation2 + $0x1e0] sm:$0xff]
    %v99 = vld [vmem:[#allocation2 + $0x1e8] sm:$0xff]
    %v100 = vld [vmem:[#allocation2 + $0x1f0] sm:$0xff]
    %v101 = vld [vmem:[#allocation2 + $0x1f8] sm:$0xff]
    %v102 = vld [vmem:[#allocation2 + $0x200] sm:$0xff]
    %v103 = vld [vmem:[#allocation2 + $0x208] sm:$0xff]
    %v104 = vld [vmem:[#allocation2 + $0x210] sm:$0xff]
    %v105 = vld [vmem:[#allocation2 + $0x218] sm:$0xff]
    %v106 = vld [vmem:[#allocation2 + $0x220] sm:$0xff]
    %v107 = vld [vmem:[#allocation2 + $0x228] sm:$0xff]
    %v108 = vld [vmem:[#allocation2 + $0x230] sm:$0xff]
    %v109 = vld [vmem:[#allocation2 + $0x238] sm:$0xff]
    %v110 = vld [vmem:[#allocation2 + $0x240] sm:$0xff]
    %v111 = vld [vmem:[#allocation2 + $0x248] sm:$0xff]
    %v112 = vld [vmem:[#allocation2 + $0x250] sm:$0xff]
    %v113 = vld [vmem:[#allocation2 + $0x258] sm:$0xff]
    %v114 = vld [vmem:[#allocation2 + $0x260] sm:$0xff]
    %v115 = vld [vmem:[#allocation2 + $0x268] sm:$0xff]
    %v116 = vld [vmem:[#allocation2 + $0x270] sm:$0xff]
    %v117 = vld [vmem:[#allocation2 + $0x278] sm:$0xff]
    %v118 = vld [vmem:[#allocation2 + $0x280] sm:$0xff]
    %v119 = vld [vmem:[#allocation2 + $0x288] sm:$0xff]
    %v120 = vld [vmem:[#allocation2 + $0x290] sm:$0xff]
    %v121 = vld [vmem:[#allocation2 + $0x298] sm:$0xff]
    %v122 = vld [vmem:[#allocation2 + $0x2a0] sm:$0xff]
    %v123 = vld [vmem:[#allocation2 + $0x2a8] sm:$0xff]
    %v124 = vld [vmem:[#allocation2 + $0x2b0] sm:$0xff]
    %v125 = vld [vmem:[#allocation2 + $0x2b8] sm:$0xff]
    %v126 = vld [vmem:[#allocation2 + $0x2c0] sm:$0xff]
    %v127 = vld [vmem:[#allocation2 + $0x2c8] sm:$0xff]
    %v128 = vld [vmem:[#allocation2 + $0x2d0] sm:$0xff]
    %v129 = vld [vmem:[#allocation2 + $0x2d8] sm:$0xff]
    %v130 = vld [vmem:[#allocation2 + $0x2e0] sm:$0xff]
    %v131 = vld [vmem:[#allocation2 + $0x2e8] sm:$0xff]
    %v132 = vld [vmem:[#allocation2 + $0x2f0] sm:$0xff]
    %v133 = vld [vmem:[#allocation2 + $0x2f8] sm:$0xff]
    %v134 = vld [vmem:[#allocation2 + $0x300] sm:$0xff]
    %v135 = vld [vmem:[#allocation2 + $0x308] sm:$0xff]
    %v136 = vld [vmem:[#allocation2 + $0x310] sm:$0xff]
    %v137 = vld [vmem:[#allocation2 + $0x318] sm:$0xff]
    %v138 = vld [vmem:[#allocation2 + $0x320] sm:$0xff]
    %v139 = vld [vmem:[#allocation2 + $0x328] sm:$0xff]
    %v140 = vld [vmem:[#allocation2 + $0x330] sm:$0xff]
    %v141 = vld [vmem:[#allocation2 + $0x338] sm:$0xff]
    %v142 = vld [vmem:[#allocation2 + $0x340] sm:$0xff]
    %v143 = vld [vmem:[#allocation2 + $0x348] sm:$0xff]
    %v144 = vld [vmem:[#allocation2 + $0x350] sm:$0xff]
    %v145 = vld [vmem:[#allocation2 + $0x358] sm:$0xff]
    %v146 = vld [vmem:[#allocation2 + $0x360] sm:$0xff]
    %v147 = vld [vmem:[#allocation2 + $0x368] sm:$0xff]
    %v148 = vld [vmem:[#allocation2 + $0x370] sm:$0xff]
    %v149 = vld [vmem:[#allocation2 + $0x378] sm:$0xff]
    %v150 = vld [vmem:[#allocation2 + $0x380] sm:$0xff]
    %v151 = vld [vmem:[#allocation2 + $0x388] sm:$0xff]
    %v152 = vld [vmem:[#allocation2 + $0x390] sm:$0xff]
    %v153 = vld [vmem:[#allocation2 + $0x398] sm:$0xff]
    %v154 = vld [vmem:[#allocation2 + $0x3a0] sm:$0xff]
    %v155 = vld [vmem:[#allocation2 + $0x3a8] sm:$0xff]
    %v156 = vld [vmem:[#allocation2 + $0x3b0] sm:$0xff]
    %v157 = vld [vmem:[#allocation2 + $0x3b8] sm:$0xff]
    %v158 = vld [vmem:[#allocation2 + $0x3c0] sm:$0xff]
    %v159 = vld [vmem:[#allocation2 + $0x3c8] sm:$0xff]
    %v160 = vld [vmem:[#allocation2 + $0x3d0] sm:$0xff]
    %v161 = vld [vmem:[#allocation2 + $0x3d8] sm:$0xff]
    %v162 = vld [vmem:[#allocation2 + $0x3e0] sm:$0xff]
    %v163 = vld [vmem:[#allocation2 + $0x3e8] sm:$0xff]
    %v164 = vld [vmem:[#allocation2 + $0x3f0] sm:$0xff]
    %v165 = vld [vmem:[#allocation2 + $0x3f8] sm:$0xff]
    %v166 = vld [vmem:[#allocation2 + $0x400] sm:$0xff]
    %v167 = vld [vmem:[#allocation2 + $0x408] sm:$0xff]
    %v168 = vld [vmem:[#allocation2 + $0x410] sm:$0xff]
    %v169 = vld [vmem:[#allocation2 + $0x418] sm:$0xff]
    %v170 = vld [vmem:[#allocation2 + $0x420] sm:$0xff]
    %v171 = vld [vmem:[#allocation2 + $0x428] sm:$0xff]
    %v172 = vld [vmem:[#allocation2 + $0x430] sm:$0xff]
    %v173 = vld [vmem:[#allocation2 + $0x438] sm:$0xff]
    %v174 = vld [vmem:[#allocation2 + $0x440] sm:$0xff]
    %v175 = vld [vmem:[#allocation2 + $0x448] sm:$0xff]
    %v176 = vld [vmem:[#allocation2 + $0x450] sm:$0xff]
    %v177 = vld [vmem:[#allocation2 + $0x458] sm:$0xff]
    %v178 = vld [vmem:[#allocation2 + $0x460] sm:$0xff]
    %v179 = vld [vmem:[#allocation2 + $0x468] sm:$0xff]
    %v180 = vld [vmem:[#allocation2 + $0x470] sm:$0xff]
    %v181 = vld [vmem:[#allocation2 + $0x478] sm:$0xff]
    %vm182 = vcmask 523264
    %v184 = vsel %vm182, %v37, 0
    %186 = vmatprep.subr.mxu0 0.0
    %187 = vmatpush1.msra.mxu0 0.0
    %188 = vmatprep.subr.mxu0 0.0
    %189 = vmatpush1.msra.mxu0 0.0
    %190 = vmatprep.subr.mxu0 0.0
    %191 = vmatpush1.msra.mxu0 0.0
    %192 = vmatprep.subr.mxu0 0.0
    %193 = vmatpush1.msra.mxu0 0.0
    %194 = vmatprep.subr.mxu0 0.0
    %195 = vmatpush1.msra.mxu0 0.0
    %196 = vmatprep.subr.mxu0 0.0
    %197 = vmatpush1.msra.mxu0 0.0
    %198 = vmatprep.subr.mxu0 0.0
    %199 = vmatpush1.msra.mxu0 0.0
    %200 = vmatprep.subr.mxu0 0.0
    %201 = vmatpush1.msra.mxu0 0.0
    %202 = vmatprep.subr.mxu0 %v165
    %203 = vmatpush1.msra.mxu0 %v164
    %204 = vmatprep.subr.mxu0 %v147
    %205 = vmatpush1.msra.mxu0 %v146
    %206 = vmatprep.subr.mxu0 %v129
    %207 = vmatpush1.msra.mxu0 %v128
    %208 = vmatprep.subr.mxu0 %v111
    %209 = vmatpush1.msra.mxu0 %v110
    %210 = vmatprep.subr.mxu0 %v93
    %211 = vmatpush1.msra.mxu0 %v92
    %212 = vmatprep.subr.mxu0 %v75
    %213 = vmatpush1.msra.mxu0 %v74
    %214 = vmatprep.subr.mxu0 %v57
    %215 = vmatpush1.msra.mxu0 %v56
    %216 = vmatprep.subr.mxu0 %v39
    %217 = vmatpush1.msra.mxu0 %v38
    %218 = vmatprep.subr.mxu0 0.0
    %219 = vmatpush2.msra.mxu0 0.0
    %220 = vmatprep.subr.mxu0 0.0
    %221 = vmatpush2.msra.mxu0 0.0
    %222 = vmatprep.subr.mxu0 0.0
    %223 = vmatpush2.msra.mxu0 0.0
    %224 = vmatprep.subr.mxu0 0.0
    %225 = vmatpush2.msra.mxu0 0.0
    %226 = vmatprep.subr.mxu0 0.0
    %227 = vmatpush2.msra.mxu0 0.0
    %228 = vmatprep.subr.mxu0 0.0
    %229 = vmatpush2.msra.mxu0 0.0
    %230 = vmatprep.subr.mxu0 0.0
    %231 = vmatpush2.msra.mxu0 0.0
    %232 = vmatprep.subr.mxu0 0.0
    %233 = vmatpush2.msra.mxu0 0.0
    %234 = vmatprep.subr.mxu0 0.0
    %235 = vmatpush2.msra.mxu0 0.0
    %236 = vmatprep.subr.mxu0 0.0
    %237 = vmatpush2.msra.mxu0 0.0
    %238 = vmatprep.subr.mxu0 0.0
    %239 = vmatpush2.msra.mxu0 0.0
    %240 = vmatprep.subr.mxu0 0.0
    %241 = vmatpush2.msra.mxu0 0.0
    %242 = vmatprep.subr.mxu0 0.0
    %243 = vmatpush2.msra.mxu0 0.0
    %244 = vmatprep.subr.mxu0 0.0
    %245 = vmatpush2.msra.mxu0 0.0
    %246 = vmatprep.subr.mxu0 0.0
    %247 = vmatpush2.msra.mxu0 0.0
    %248 = vmatprep.subr.mxu0 0.0
    %249 = vmatpush2.msra.mxu0 0.0
    %250 = vmatprep.mubr.f32.mxu0 0.0
    %251 = vmatmul.mubr.f32.gmra.mxu0 %v184
    %v252 = vpop.f32.mrf.mxu0
    %v253 = vadd.f32 0.0, %v252
    %v254 = vpop.f32.mrf.mxu0
    %v255 = vadd.f32 0.0, %v254
    %256 = vdwg.mxu0
    %257 = vmatprep.subr.mxu0 0.0
    %258 = vmatpush1.msra.mxu0 0.0
    %259 = vmatprep.subr.mxu0 0.0
    %260 = vmatpush1.msra.mxu0 0.0
    %261 = vmatprep.subr.mxu0 0.0
    %262 = vmatpush1.msra.mxu0 0.0
    %263 = vmatprep.subr.mxu0 0.0
    %264 = vmatpush1.msra.mxu0 0.0
    %265 = vmatprep.subr.mxu0 0.0
    %266 = vmatpush1.msra.mxu0 0.0
    %267 = vmatprep.subr.mxu0 0.0
    %268 = vmatpush1.msra.mxu0 0.0
    %269 = vmatprep.subr.mxu0 0.0
    %270 = vmatpush1.msra.mxu0 0.0
    %271 = vmatprep.subr.mxu0 0.0
    %272 = vmatpush1.msra.mxu0 0.0
    %273 = vmatprep.subr.mxu0 %v167
    %274 = vmatpush1.msra.mxu0 %v166
    %275 = vmatprep.subr.mxu0 %v149
    %276 = vmatpush1.msra.mxu0 %v148
    %277 = vmatprep.subr.mxu0 %v131
    %278 = vmatpush1.msra.mxu0 %v130
    %279 = vmatprep.subr.mxu0 %v113
    %280 = vmatpush1.msra.mxu0 %v112
    %281 = vmatprep.subr.mxu0 %v95
    %282 = vmatpush1.msra.mxu0 %v94
    %283 = vmatprep.subr.mxu0 %v77
    %284 = vmatpush1.msra.mxu0 %v76
    %285 = vmatprep.subr.mxu0 %v59
    %286 = vmatpush1.msra.mxu0 %v58
    %287 = vmatprep.subr.mxu0 %v41
    %288 = vmatpush1.msra.mxu0 %v40
    %289 = vmatprep.subr.mxu0 0.0
    %290 = vmatpush2.msra.mxu0 0.0
    %291 = vmatprep.subr.mxu0 0.0
    %292 = vmatpush2.msra.mxu0 0.0
    %293 = vmatprep.subr.mxu0 0.0
    %294 = vmatpush2.msra.mxu0 0.0
    %295 = vmatprep.subr.mxu0 0.0
    %296 = vmatpush2.msra.mxu0 0.0
    %297 = vmatprep.subr.mxu0 0.0
    %298 = vmatpush2.msra.mxu0 0.0
    %299 = vmatprep.subr.mxu0 0.0
    %300 = vmatpush2.msra.mxu0 0.0
    %301 = vmatprep.subr.mxu0 0.0
    %302 = vmatpush2.msra.mxu0 0.0
    %303 = vmatprep.subr.mxu0 0.0
    %304 = vmatpush2.msra.mxu0 0.0
    %305 = vmatprep.subr.mxu0 0.0
    %306 = vmatpush2.msra.mxu0 0.0
    %307 = vmatprep.subr.mxu0 0.0
    %308 = vmatpush2.msra.mxu0 0.0
    %309 = vmatprep.subr.mxu0 0.0
    %310 = vmatpush2.msra.mxu0 0.0
    %311 = vmatprep.subr.mxu0 0.0
    %312 = vmatpush2.msra.mxu0 0.0
    %313 = vmatprep.subr.mxu0 0.0
    %314 = vmatpush2.msra.mxu0 0.0
    %315 = vmatprep.subr.mxu0 0.0
    %316 = vmatpush2.msra.mxu0 0.0
    %317 = vmatprep.subr.mxu0 0.0
    %318 = vmatpush2.msra.mxu0 0.0
    %319 = vmatprep.subr.mxu0 0.0
    %320 = vmatpush2.msra.mxu0 0.0
    %321 = vmatprep.mubr.f32.mxu0 0.0
    %322 = vmatmul.mubr.f32.gmra.mxu0 %v184
    %v323 = vpop.f32.mrf.mxu0
    %v324 = vadd.f32 0.0, %v323
    %v325 = vpop.f32.mrf.mxu0
    %v326 = vadd.f32 0.0, %v325
    %327 = vdwg.mxu0
    %328 = vmatprep.subr.mxu0 0.0
    %329 = vmatpush1.msra.mxu0 0.0
    %330 = vmatprep.subr.mxu0 0.0
    %331 = vmatpush1.msra.mxu0 0.0
    %332 = vmatprep.subr.mxu0 0.0
    %333 = vmatpush1.msra.mxu0 0.0
    %334 = vmatprep.subr.mxu0 0.0
    %335 = vmatpush1.msra.mxu0 0.0
    %336 = vmatprep.subr.mxu0 0.0
    %337 = vmatpush1.msra.mxu0 0.0
    %338 = vmatprep.subr.mxu0 0.0
    %339 = vmatpush1.msra.mxu0 0.0
    %340 = vmatprep.subr.mxu0 0.0
    %341 = vmatpush1.msra.mxu0 0.0
    %342 = vmatprep.subr.mxu0 0.0
    %343 = vmatpush1.msra.mxu0 0.0
    %344 = vmatprep.subr.mxu0 %v169
    %345 = vmatpush1.msra.mxu0 %v168
    %346 = vmatprep.subr.mxu0 %v151
    %347 = vmatpush1.msra.mxu0 %v150
    %348 = vmatprep.subr.mxu0 %v133
    %349 = vmatpush1.msra.mxu0 %v132
    %350 = vmatprep.subr.mxu0 %v115
    %351 = vmatpush1.msra.mxu0 %v114
    %352 = vmatprep.subr.mxu0 %v97
    %353 = vmatpush1.msra.mxu0 %v96
    %354 = vmatprep.subr.mxu0 %v79
    %355 = vmatpush1.msra.mxu0 %v78
    %356 = vmatprep.subr.mxu0 %v61
    %357 = vmatpush1.msra.mxu0 %v60
    %358 = vmatprep.subr.mxu0 %v43
    %359 = vmatpush1.msra.mxu0 %v42
    %360 = vmatprep.subr.mxu0 0.0
    %361 = vmatpush2.msra.mxu0 0.0
    %362 = vmatprep.subr.mxu0 0.0
    %363 = vmatpush2.msra.mxu0 0.0
    %364 = vmatprep.subr.mxu0 0.0
    %365 = vmatpush2.msra.mxu0 0.0
    %366 = vmatprep.subr.mxu0 0.0
    %367 = vmatpush2.msra.mxu0 0.0
    %368 = vmatprep.subr.mxu0 0.0
    %369 = vmatpush2.msra.mxu0 0.0
    %370 = vmatprep.subr.mxu0 0.0
    %371 = vmatpush2.msra.mxu0 0.0
    %372 = vmatprep.subr.mxu0 0.0
    %373 = vmatpush2.msra.mxu0 0.0
    %374 = vmatprep.subr.mxu0 0.0
    %375 = vmatpush2.msra.mxu0 0.0
    %376 = vmatprep.subr.mxu0 0.0
    %377 = vmatpush2.msra.mxu0 0.0
    %378 = vmatprep.subr.mxu0 0.0
    %379 = vmatpush2.msra.mxu0 0.0
    %380 = vmatprep.subr.mxu0 0.0
    %381 = vmatpush2.msra.mxu0 0.0
    %382 = vmatprep.subr.mxu0 0.0
    %383 = vmatpush2.msra.mxu0 0.0
    %384 = vmatprep.subr.mxu0 0.0
    %385 = vmatpush2.msra.mxu0 0.0
    %386 = vmatprep.subr.mxu0 0.0
    %387 = vmatpush2.msra.mxu0 0.0
    %388 = vmatprep.subr.mxu0 0.0
    %389 = vmatpush2.msra.mxu0 0.0
    %390 = vmatprep.subr.mxu0 0.0
    %391 = vmatpush2.msra.mxu0 0.0
    %392 = vmatprep.mubr.f32.mxu0 0.0
    %393 = vmatmul.mubr.f32.gmra.mxu0 %v184
    %v394 = vpop.f32.mrf.mxu0
    %v395 = vadd.f32 0.0, %v394
    %v396 = vpop.f32.mrf.mxu0
    %v397 = vadd.f32 0.0, %v396
    %398 = vdwg.mxu0
    %399 = vmatprep.subr.mxu0 0.0
    %400 = vmatpush1.msra.mxu0 0.0
    %401 = vmatprep.subr.mxu0 0.0
    %402 = vmatpush1.msra.mxu0 0.0
    %403 = vmatprep.subr.mxu0 0.0
    %404 = vmatpush1.msra.mxu0 0.0
    %405 = vmatprep.subr.mxu0 0.0
    %406 = vmatpush1.msra.mxu0 0.0
    %407 = vmatprep.subr.mxu0 0.0
    %408 = vmatpush1.msra.mxu0 0.0
    %409 = vmatprep.subr.mxu0 0.0
    %410 = vmatpush1.msra.mxu0 0.0
    %411 = vmatprep.subr.mxu0 0.0
    %412 = vmatpush1.msra.mxu0 0.0
    %413 = vmatprep.subr.mxu0 0.0
    %414 = vmatpush1.msra.mxu0 0.0
    %415 = vmatprep.subr.mxu0 %v171
    %416 = vmatpush1.msra.mxu0 %v170
    %417 = vmatprep.subr.mxu0 %v153
    %418 = vmatpush1.msra.mxu0 %v152
    %419 = vmatprep.subr.mxu0 %v135
    %420 = vmatpush1.msra.mxu0 %v134
    %421 = vmatprep.subr.mxu0 %v117
    %422 = vmatpush1.msra.mxu0 %v116
    %423 = vmatprep.subr.mxu0 %v99
    %424 = vmatpush1.msra.mxu0 %v98
    %425 = vmatprep.subr.mxu0 %v81
    %426 = vmatpush1.msra.mxu0 %v80
    %427 = vmatprep.subr.mxu0 %v63
    %428 = vmatpush1.msra.mxu0 %v62
    %429 = vmatprep.subr.mxu0 %v45
    %430 = vmatpush1.msra.mxu0 %v44
    %431 = vmatprep.subr.mxu0 0.0
    %432 = vmatpush2.msra.mxu0 0.0
    %433 = vmatprep.subr.mxu0 0.0
    %434 = vmatpush2.msra.mxu0 0.0
    %435 = vmatprep.subr.mxu0 0.0
    %436 = vmatpush2.msra.mxu0 0.0
    %437 = vmatprep.subr.mxu0 0.0
    %438 = vmatpush2.msra.mxu0 0.0
    %439 = vmatprep.subr.mxu0 0.0
    %440 = vmatpush2.msra.mxu0 0.0
    %441 = vmatprep.subr.mxu0 0.0
    %442 = vmatpush2.msra.mxu0 0.0
    %443 = vmatprep.subr.mxu0 0.0
    %444 = vmatpush2.msra.mxu0 0.0
    %445 = vmatprep.subr.mxu0 0.0
    %446 = vmatpush2.msra.mxu0 0.0
    %447 = vmatprep.subr.mxu0 0.0
    %448 = vmatpush2.msra.mxu0 0.0
    %449 = vmatprep.subr.mxu0 0.0
    %450 = vmatpush2.msra.mxu0 0.0
    %451 = vmatprep.subr.mxu0 0.0
    %452 = vmatpush2.msra.mxu0 0.0
    %453 = vmatprep.subr.mxu0 0.0
    %454 = vmatpush2.msra.mxu0 0.0
    %455 = vmatprep.subr.mxu0 0.0
    %456 = vmatpush2.msra.mxu0 0.0
    %457 = vmatprep.subr.mxu0 0.0
    %458 = vmatpush2.msra.mxu0 0.0
    %459 = vmatprep.subr.mxu0 0.0
    %460 = vmatpush2.msra.mxu0 0.0
    %461 = vmatprep.subr.mxu0 0.0
    %462 = vmatpush2.msra.mxu0 0.0
    %463 = vmatprep.mubr.f32.mxu0 0.0
    %464 = vmatmul.mubr.f32.gmra.mxu0 %v184
    %v465 = vpop.f32.mrf.mxu0
    %v466 = vadd.f32 0.0, %v465
    %v467 = vpop.f32.mrf.mxu0
    %v468 = vadd.f32 0.0, %v467
    %469 = vdwg.mxu0
    %470 = vmatprep.subr.mxu0 0.0
    %471 = vmatpush1.msra.mxu0 0.0
    %472 = vmatprep.subr.mxu0 0.0
    %473 = vmatpush1.msra.mxu0 0.0
    %474 = vmatprep.subr.mxu0 0.0
    %475 = vmatpush1.msra.mxu0 0.0
    %476 = vmatprep.subr.mxu0 0.0
    %477 = vmatpush1.msra.mxu0 0.0
    %478 = vmatprep.subr.mxu0 0.0
    %479 = vmatpush1.msra.mxu0 0.0
    %480 = vmatprep.subr.mxu0 0.0
    %481 = vmatpush1.msra.mxu0 0.0
    %482 = vmatprep.subr.mxu0 0.0
    %483 = vmatpush1.msra.mxu0 0.0
    %484 = vmatprep.subr.mxu0 0.0
    %485 = vmatpush1.msra.mxu0 0.0
    %486 = vmatprep.subr.mxu0 %v173
    %487 = vmatpush1.msra.mxu0 %v172
    %488 = vmatprep.subr.mxu0 %v155
    %489 = vmatpush1.msra.mxu0 %v154
    %490 = vmatprep.subr.mxu0 %v137
    %491 = vmatpush1.msra.mxu0 %v136
    %492 = vmatprep.subr.mxu0 %v119
    %493 = vmatpush1.msra.mxu0 %v118
    %494 = vmatprep.subr.mxu0 %v101
    %495 = vmatpush1.msra.mxu0 %v100
    %496 = vmatprep.subr.mxu0 %v83
    %497 = vmatpush1.msra.mxu0 %v82
    %498 = vmatprep.subr.mxu0 %v65
    %499 = vmatpush1.msra.mxu0 %v64
    %500 = vmatprep.subr.mxu0 %v47
    %501 = vmatpush1.msra.mxu0 %v46
    %502 = vmatprep.subr.mxu0 0.0
    %503 = vmatpush2.msra.mxu0 0.0
    %504 = vmatprep.subr.mxu0 0.0
    %505 = vmatpush2.msra.mxu0 0.0
    %506 = vmatprep.subr.mxu0 0.0
    %507 = vmatpush2.msra.mxu0 0.0
    %508 = vmatprep.subr.mxu0 0.0
    %509 = vmatpush2.msra.mxu0 0.0
    %510 = vmatprep.subr.mxu0 0.0
    %511 = vmatpush2.msra.mxu0 0.0
    %512 = vmatprep.subr.mxu0 0.0
    %513 = vmatpush2.msra.mxu0 0.0
    %514 = vmatprep.subr.mxu0 0.0
    %515 = vmatpush2.msra.mxu0 0.0
    %516 = vmatprep.subr.mxu0 0.0
    %517 = vmatpush2.msra.mxu0 0.0
    %518 = vmatprep.subr.mxu0 0.0
    %519 = vmatpush2.msra.mxu0 0.0
    %520 = vmatprep.subr.mxu0 0.0
    %521 = vmatpush2.msra.mxu0 0.0
    %522 = vmatprep.subr.mxu0 0.0
    %523 = vmatpush2.msra.mxu0 0.0
    %524 = vmatprep.subr.mxu0 0.0
    %525 = vmatpush2.msra.mxu0 0.0
    %526 = vmatprep.subr.mxu0 0.0
    %527 = vmatpush2.msra.mxu0 0.0
    %528 = vmatprep.subr.mxu0 0.0
    %529 = vmatpush2.msra.mxu0 0.0
    %530 = vmatprep.subr.mxu0 0.0
    %531 = vmatpush2.msra.mxu0 0.0
    %532 = vmatprep.subr.mxu0 0.0
    %533 = vmatpush2.msra.mxu0 0.0
    %534 = vmatprep.mubr.f32.mxu0 0.0
    %535 = vmatmul.mubr.f32.gmra.mxu0 %v184
    %v536 = vpop.f32.mrf.mxu0
    %v537 = vadd.f32 0.0, %v536
    %v538 = vpop.f32.mrf.mxu0
    %v539 = vadd.f32 0.0, %v538
    %540 = vdwg.mxu0
    %541 = vmatprep.subr.mxu0 0.0
    %542 = vmatpush1.msra.mxu0 0.0
    %543 = vmatprep.subr.mxu0 0.0
    %544 = vmatpush1.msra.mxu0 0.0
    %545 = vmatprep.subr.mxu0 0.0
    %546 = vmatpush1.msra.mxu0 0.0
    %547 = vmatprep.subr.mxu0 0.0
    %548 = vmatpush1.msra.mxu0 0.0
    %549 = vmatprep.subr.mxu0 0.0
    %550 = vmatpush1.msra.mxu0 0.0
    %551 = vmatprep.subr.mxu0 0.0
    %552 = vmatpush1.msra.mxu0 0.0
    %553 = vmatprep.subr.mxu0 0.0
    %554 = vmatpush1.msra.mxu0 0.0
    %555 = vmatprep.subr.mxu0 0.0
    %556 = vmatpush1.msra.mxu0 0.0
    %557 = vmatprep.subr.mxu0 %v175
    %558 = vmatpush1.msra.mxu0 %v174
    %559 = vmatprep.subr.mxu0 %v157
    %560 = vmatpush1.msra.mxu0 %v156
    %561 = vmatprep.subr.mxu0 %v139
    %562 = vmatpush1.msra.mxu0 %v138
    %563 = vmatprep.subr.mxu0 %v121
    %564 = vmatpush1.msra.mxu0 %v120
    %565 = vmatprep.subr.mxu0 %v103
    %566 = vmatpush1.msra.mxu0 %v102
    %567 = vmatprep.subr.mxu0 %v85
    %568 = vmatpush1.msra.mxu0 %v84
    %569 = vmatprep.subr.mxu0 %v67
    %570 = vmatpush1.msra.mxu0 %v66
    %571 = vmatprep.subr.mxu0 %v49
    %572 = vmatpush1.msra.mxu0 %v48
    %573 = vmatprep.subr.mxu0 0.0
    %574 = vmatpush2.msra.mxu0 0.0
    %575 = vmatprep.subr.mxu0 0.0
    %576 = vmatpush2.msra.mxu0 0.0
    %577 = vmatprep.subr.mxu0 0.0
    %578 = vmatpush2.msra.mxu0 0.0
    %579 = vmatprep.subr.mxu0 0.0
    %580 = vmatpush2.msra.mxu0 0.0
    %581 = vmatprep.subr.mxu0 0.0
    %582 = vmatpush2.msra.mxu0 0.0
    %583 = vmatprep.subr.mxu0 0.0
    %584 = vmatpush2.msra.mxu0 0.0
    %585 = vmatprep.subr.mxu0 0.0
    %586 = vmatpush2.msra.mxu0 0.0
    %587 = vmatprep.subr.mxu0 0.0
    %588 = vmatpush2.msra.mxu0 0.0
    %589 = vmatprep.subr.mxu0 0.0
    %590 = vmatpush2.msra.mxu0 0.0
    %591 = vmatprep.subr.mxu0 0.0
    %592 = vmatpush2.msra.mxu0 0.0
    %593 = vmatprep.subr.mxu0 0.0
    %594 = vmatpush2.msra.mxu0 0.0
    %595 = vmatprep.subr.mxu0 0.0
    %596 = vmatpush2.msra.mxu0 0.0
    %597 = vmatprep.subr.mxu0 0.0
    %598 = vmatpush2.msra.mxu0 0.0
    %599 = vmatprep.subr.mxu0 0.0
    %600 = vmatpush2.msra.mxu0 0.0
    %601 = vmatprep.subr.mxu0 0.0
    %602 = vmatpush2.msra.mxu0 0.0
    %603 = vmatprep.subr.mxu0 0.0
    %604 = vmatpush2.msra.mxu0 0.0
    %605 = vmatprep.mubr.f32.mxu0 0.0
    %606 = vmatmul.mubr.f32.gmra.mxu0 %v184
    %v607 = vpop.f32.mrf.mxu0
    %v608 = vadd.f32 0.0, %v607
    %v609 = vpop.f32.mrf.mxu0
    %v610 = vadd.f32 0.0, %v609
    %611 = vdwg.mxu0
    %612 = vmatprep.subr.mxu0 0.0
    %613 = vmatpush1.msra.mxu0 0.0
    %614 = vmatprep.subr.mxu0 0.0
    %615 = vmatpush1.msra.mxu0 0.0
    %616 = vmatprep.subr.mxu0 0.0
    %617 = vmatpush1.msra.mxu0 0.0
    %618 = vmatprep.subr.mxu0 0.0
    %619 = vmatpush1.msra.mxu0 0.0
    %620 = vmatprep.subr.mxu0 0.0
    %621 = vmatpush1.msra.mxu0 0.0
    %622 = vmatprep.subr.mxu0 0.0
    %623 = vmatpush1.msra.mxu0 0.0
    %624 = vmatprep.subr.mxu0 0.0
    %625 = vmatpush1.msra.mxu0 0.0
    %626 = vmatprep.subr.mxu0 0.0
    %627 = vmatpush1.msra.mxu0 0.0
    %628 = vmatprep.subr.mxu0 %v177
    %629 = vmatpush1.msra.mxu0 %v176
    %630 = vmatprep.subr.mxu0 %v159
    %631 = vmatpush1.msra.mxu0 %v158
    %632 = vmatprep.subr.mxu0 %v141
    %633 = vmatpush1.msra.mxu0 %v140
    %634 = vmatprep.subr.mxu0 %v123
    %635 = vmatpush1.msra.mxu0 %v122
    %636 = vmatprep.subr.mxu0 %v105
    %637 = vmatpush1.msra.mxu0 %v104
    %638 = vmatprep.subr.mxu0 %v87
    %639 = vmatpush1.msra.mxu0 %v86
    %640 = vmatprep.subr.mxu0 %v69
    %641 = vmatpush1.msra.mxu0 %v68
    %642 = vmatprep.subr.mxu0 %v51
    %643 = vmatpush1.msra.mxu0 %v50
    %644 = vmatprep.subr.mxu0 0.0
    %645 = vmatpush2.msra.mxu0 0.0
    %646 = vmatprep.subr.mxu0 0.0
    %647 = vmatpush2.msra.mxu0 0.0
    %648 = vmatprep.subr.mxu0 0.0
    %649 = vmatpush2.msra.mxu0 0.0
    %650 = vmatprep.subr.mxu0 0.0
    %651 = vmatpush2.msra.mxu0 0.0
    %652 = vmatprep.subr.mxu0 0.0
    %653 = vmatpush2.msra.mxu0 0.0
    %654 = vmatprep.subr.mxu0 0.0
    %655 = vmatpush2.msra.mxu0 0.0
    %656 = vmatprep.subr.mxu0 0.0
    %657 = vmatpush2.msra.mxu0 0.0
    %658 = vmatprep.subr.mxu0 0.0
    %659 = vmatpush2.msra.mxu0 0.0
    %660 = vmatprep.subr.mxu0 0.0
    %661 = vmatpush2.msra.mxu0 0.0
    %662 = vmatprep.subr.mxu0 0.0
    %663 = vmatpush2.msra.mxu0 0.0
    %664 = vmatprep.subr.mxu0 0.0
    %665 = vmatpush2.msra.mxu0 0.0
    %666 = vmatprep.subr.mxu0 0.0
    %667 = vmatpush2.msra.mxu0 0.0
    %668 = vmatprep.subr.mxu0 0.0
    %669 = vmatpush2.msra.mxu0 0.0
    %670 = vmatprep.subr.mxu0 0.0
    %671 = vmatpush2.msra.mxu0 0.0
    %672 = vmatprep.subr.mxu0 0.0
    %673 = vmatpush2.msra.mxu0 0.0
    %674 = vmatprep.subr.mxu0 0.0
    %675 = vmatpush2.msra.mxu0 0.0
    %676 = vmatprep.mubr.f32.mxu0 0.0
    %677 = vmatmul.mubr.f32.gmra.mxu0 %v184
    %v678 = vpop.f32.mrf.mxu0
    %v679 = vadd.f32 0.0, %v678
    %v680 = vpop.f32.mrf.mxu0
    %v681 = vadd.f32 0.0, %v680
    %682 = vdwg.mxu0
    %683 = vmatprep.subr.mxu0 0.0
    %684 = vmatpush1.msra.mxu0 0.0
    %685 = vmatprep.subr.mxu0 0.0
    %686 = vmatpush1.msra.mxu0 0.0
    %687 = vmatprep.subr.mxu0 0.0
    %688 = vmatpush1.msra.mxu0 0.0
    %689 = vmatprep.subr.mxu0 0.0
    %690 = vmatpush1.msra.mxu0 0.0
    %691 = vmatprep.subr.mxu0 0.0
    %692 = vmatpush1.msra.mxu0 0.0
    %693 = vmatprep.subr.mxu0 0.0
    %694 = vmatpush1.msra.mxu0 0.0
    %695 = vmatprep.subr.mxu0 0.0
    %696 = vmatpush1.msra.mxu0 0.0
    %697 = vmatprep.subr.mxu0 0.0
    %698 = vmatpush1.msra.mxu0 0.0
    %699 = vmatprep.subr.mxu0 %v179
    %700 = vmatpush1.msra.mxu0 %v178
    %701 = vmatprep.subr.mxu0 %v161
    %702 = vmatpush1.msra.mxu0 %v160
    %703 = vmatprep.subr.mxu0 %v143
    %704 = vmatpush1.msra.mxu0 %v142
    %705 = vmatprep.subr.mxu0 %v125
    %706 = vmatpush1.msra.mxu0 %v124
    %707 = vmatprep.subr.mxu0 %v107
    %708 = vmatpush1.msra.mxu0 %v106
    %709 = vmatprep.subr.mxu0 %v89
    %710 = vmatpush1.msra.mxu0 %v88
    %711 = vmatprep.subr.mxu0 %v71
    %712 = vmatpush1.msra.mxu0 %v70
    %713 = vmatprep.subr.mxu0 %v53
    %714 = vmatpush1.msra.mxu0 %v52
    %715 = vmatprep.subr.mxu0 0.0
    %716 = vmatpush2.msra.mxu0 0.0
    %717 = vmatprep.subr.mxu0 0.0
    %718 = vmatpush2.msra.mxu0 0.0
    %719 = vmatprep.subr.mxu0 0.0
    %720 = vmatpush2.msra.mxu0 0.0
    %721 = vmatprep.subr.mxu0 0.0
    %722 = vmatpush2.msra.mxu0 0.0
    %723 = vmatprep.subr.mxu0 0.0
    %724 = vmatpush2.msra.mxu0 0.0
    %725 = vmatprep.subr.mxu0 0.0
    %726 = vmatpush2.msra.mxu0 0.0
    %727 = vmatprep.subr.mxu0 0.0
    %728 = vmatpush2.msra.mxu0 0.0
    %729 = vmatprep.subr.mxu0 0.0
    %730 = vmatpush2.msra.mxu0 0.0
    %731 = vmatprep.subr.mxu0 0.0
    %732 = vmatpush2.msra.mxu0 0.0
    %733 = vmatprep.subr.mxu0 0.0
    %734 = vmatpush2.msra.mxu0 0.0
    %735 = vmatprep.subr.mxu0 0.0
    %736 = vmatpush2.msra.mxu0 0.0
    %737 = vmatprep.subr.mxu0 0.0
    %738 = vmatpush2.msra.mxu0 0.0
    %739 = vmatprep.subr.mxu0 0.0
    %740 = vmatpush2.msra.mxu0 0.0
    %741 = vmatprep.subr.mxu0 0.0
    %742 = vmatpush2.msra.mxu0 0.0
    %743 = vmatprep.subr.mxu0 0.0
    %744 = vmatpush2.msra.mxu0 0.0
    %745 = vmatprep.subr.mxu0 0.0
    %746 = vmatpush2.msra.mxu0 0.0
    %747 = vmatprep.mubr.f32.mxu0 0.0
    %748 = vmatmul.mubr.f32.gmra.mxu0 %v184
    %v749 = vpop.f32.mrf.mxu0
    %v750 = vadd.f32 0.0, %v749
    %v751 = vpop.f32.mrf.mxu0
    %v752 = vadd.f32 0.0, %v751
    %753 = vdwg.mxu0
    %754 = vmatprep.subr.mxu0 0.0
    %755 = vmatpush1.msra.mxu0 0.0
    %756 = vmatprep.subr.mxu0 0.0
    %757 = vmatpush1.msra.mxu0 0.0
    %758 = vmatprep.subr.mxu0 0.0
    %759 = vmatpush1.msra.mxu0 0.0
    %760 = vmatprep.subr.mxu0 0.0
    %761 = vmatpush1.msra.mxu0 0.0
    %762 = vmatprep.subr.mxu0 0.0
    %763 = vmatpush1.msra.mxu0 0.0
    %764 = vmatprep.subr.mxu0 0.0
    %765 = vmatpush1.msra.mxu0 0.0
    %766 = vmatprep.subr.mxu0 0.0
    %767 = vmatpush1.msra.mxu0 0.0
    %768 = vmatprep.subr.mxu0 0.0
    %769 = vmatpush1.msra.mxu0 0.0
    %770 = vmatprep.subr.mxu0 %v181
    %771 = vmatpush1.msra.mxu0 %v180
    %772 = vmatprep.subr.mxu0 %v163
    %773 = vmatpush1.msra.mxu0 %v162
    %774 = vmatprep.subr.mxu0 %v145
    %775 = vmatpush1.msra.mxu0 %v144
    %776 = vmatprep.subr.mxu0 %v127
    %777 = vmatpush1.msra.mxu0 %v126
    %778 = vmatprep.subr.mxu0 %v109
    %779 = vmatpush1.msra.mxu0 %v108
    %780 = vmatprep.subr.mxu0 %v91
    %781 = vmatpush1.msra.mxu0 %v90
    %782 = vmatprep.subr.mxu0 %v73
    %783 = vmatpush1.msra.mxu0 %v72
    %784 = vmatprep.subr.mxu0 %v55
    %785 = vmatpush1.msra.mxu0 %v54
    %786 = vmatprep.subr.mxu0 0.0
    %787 = vmatpush2.msra.mxu0 0.0
    %788 = vmatprep.subr.mxu0 0.0
    %789 = vmatpush2.msra.mxu0 0.0
    %790 = vmatprep.subr.mxu0 0.0
    %791 = vmatpush2.msra.mxu0 0.0
    %792 = vmatprep.subr.mxu0 0.0
    %793 = vmatpush2.msra.mxu0 0.0
    %794 = vmatprep.subr.mxu0 0.0
    %795 = vmatpush2.msra.mxu0 0.0
    %796 = vmatprep.subr.mxu0 0.0
    %797 = vmatpush2.msra.mxu0 0.0
    %798 = vmatprep.subr.mxu0 0.0
    %799 = vmatpush2.msra.mxu0 0.0
    %800 = vmatprep.subr.mxu0 0.0
    %801 = vmatpush2.msra.mxu0 0.0
    %802 = vmatprep.subr.mxu0 0.0
    %803 = vmatpush2.msra.mxu0 0.0
    %804 = vmatprep.subr.mxu0 0.0
    %805 = vmatpush2.msra.mxu0 0.0
    %806 = vmatprep.subr.mxu0 0.0
    %807 = vmatpush2.msra.mxu0 0.0
    %808 = vmatprep.subr.mxu0 0.0
    %809 = vmatpush2.msra.mxu0 0.0
    %810 = vmatprep.subr.mxu0 0.0
    %811 = vmatpush2.msra.mxu0 0.0
    %812 = vmatprep.subr.mxu0 0.0
    %813 = vmatpush2.msra.mxu0 0.0
    %814 = vmatprep.subr.mxu0 0.0
    %815 = vmatpush2.msra.mxu0 0.0
    %816 = vmatprep.subr.mxu0 0.0
    %817 = vmatpush2.msra.mxu0 0.0
    %818 = vmatprep.mubr.f32.mxu0 0.0
    %819 = vmatmul.mubr.f32.gmra.mxu0 %v184
    %v820 = vpop.f32.mrf.mxu0
    %v821 = vadd.f32 0.0, %v820
    %v822 = vpop.f32.mrf.mxu0
    %v823 = vadd.f32 0.0, %v822
    %824 = vdwg.mxu0
    %v825 = vld [vmem:[%s3] sm:$0xff]
    %v826 = vld [vmem:[%s3 + $0x8] sm:$0xff]
    %v827 = vld [vmem:[%s3 + $0x10] sm:$0xff]
    %v828 = vld [vmem:[%s3 + $0x18] sm:$0xff]
    %v829 = vld [vmem:[%s2] sm:$0xff]
    %v830 = vld [vmem:[%s2 + $0x8] sm:$0xff]
    %vm831 = vcmask 64512
    %v833 = vsel %vm831, %v829, 0
    %v836 = vsel %vm831, %v830, 0
    %838 = vmatprep.subr.mxu0 0.0
    %839 = vmatpush1.msra.mxu0 0.0
    %840 = vmatprep.subr.mxu0 0.0
    %841 = vmatpush1.msra.mxu0 0.0
    %842 = vmatprep.subr.mxu0 0.0
    %843 = vmatpush1.msra.mxu0 0.0
    %844 = vmatprep.subr.mxu0 0.0
    %845 = vmatpush1.msra.mxu0 0.0
    %846 = vmatprep.subr.mxu0 0.0
    %847 = vmatpush1.msra.mxu0 0.0
    %848 = vmatprep.subr.mxu0 0.0
    %849 = vmatpush1.msra.mxu0 0.0
    %850 = vmatprep.subr.mxu0 0.0
    %851 = vmatpush1.msra.mxu0 0.0
    %852 = vmatprep.subr.mxu0 0.0
    %853 = vmatpush1.msra.mxu0 0.0
    %854 = vmatprep.subr.mxu0 0.0
    %855 = vmatpush1.msra.mxu0 0.0
    %856 = vmatprep.subr.mxu0 0.0
    %857 = vmatpush1.msra.mxu0 0.0
    %858 = vmatprep.subr.mxu0 0.0
    %859 = vmatpush1.msra.mxu0 0.0
    %860 = vmatprep.subr.mxu0 0.0
    %861 = vmatpush1.msra.mxu0 0.0
    %862 = vmatprep.subr.mxu0 0.0
    %863 = vmatpush1.msra.mxu0 0.0
    %864 = vmatprep.subr.mxu0 0.0
    %865 = vmatpush1.msra.mxu0 0.0
    %866 = vmatprep.subr.mxu0 0.0
    %867 = vmatpush1.msra.mxu0 0.0
    %868 = vmatprep.subr.mxu0 %v255
    %869 = vmatpush1.msra.mxu0 %v253
    %870 = vmatprep.subr.mxu0 0.0
    %871 = vmatpush2.msra.mxu0 0.0
    %872 = vmatprep.subr.mxu0 0.0
    %873 = vmatpush2.msra.mxu0 0.0
    %874 = vmatprep.subr.mxu0 0.0
    %875 = vmatpush2.msra.mxu0 0.0
    %876 = vmatprep.subr.mxu0 0.0
    %877 = vmatpush2.msra.mxu0 0.0
    %878 = vmatprep.subr.mxu0 0.0
    %879 = vmatpush2.msra.mxu0 0.0
    %880 = vmatprep.subr.mxu0 0.0
    %881 = vmatpush2.msra.mxu0 0.0
    %882 = vmatprep.subr.mxu0 0.0
    %883 = vmatpush2.msra.mxu0 0.0
    %884 = vmatprep.subr.mxu0 0.0
    %885 = vmatpush2.msra.mxu0 0.0
    %886 = vmatprep.subr.mxu0 0.0
    %887 = vmatpush2.msra.mxu0 0.0
    %888 = vmatprep.subr.mxu0 0.0
    %889 = vmatpush2.msra.mxu0 0.0
    %890 = vmatprep.subr.mxu0 0.0
    %891 = vmatpush2.msra.mxu0 0.0
    %892 = vmatprep.subr.mxu0 0.0
    %893 = vmatpush2.msra.mxu0 0.0
    %894 = vmatprep.subr.mxu0 0.0
    %895 = vmatpush2.msra.mxu0 0.0
    %896 = vmatprep.subr.mxu0 0.0
    %897 = vmatpush2.msra.mxu0 0.0
    %898 = vmatprep.subr.mxu0 0.0
    %899 = vmatpush2.msra.mxu0 0.0
    %900 = vmatprep.subr.mxu0 0.0
    %901 = vmatpush2.msra.mxu0 0.0
    %902 = vmatprep.mubr.f32.mxu0 0.0
    %903 = vmatmul.mubr.f32.gmra.mxu0 %v833
    %v904 = vpop.f32.mrf.mxu0
    %v905 = vadd.f32 0.0, %v904
    %v906 = vpop.f32.mrf.mxu0
    %v907 = vadd.f32 0.0, %v906
    %908 = vmatprep.mubr.f32.mxu0 0.0
    %909 = vmatmul.mubr.f32.gmra.mxu0 %v836
    %v910 = vpop.f32.mrf.mxu0
    %v911 = vadd.f32 0.0, %v910
    %v912 = vpop.f32.mrf.mxu0
    %v913 = vadd.f32 0.0, %v912
    %914 = vdwg.mxu0
    %v915 = vadd.f32 %v825, %v905
    %v916 = vadd.f32 %v826, %v907
    %v917 = vadd.f32 %v827, %v911
    %v918 = vadd.f32 %v828, %v913
    %s919 = scalar_lea.vmem %s2, 16
    %v920 = vld [vmem:[%s919] sm:$0xff]
    %v921 = vld [vmem:[%s919 + $0x8] sm:$0xff]
    %v923 = vsel %vm831, %v920, 0
    %v926 = vsel %vm831, %v921, 0
    %928 = vmatprep.subr.mxu0 0.0
    %929 = vmatpush1.msra.mxu0 0.0
    %930 = vmatprep.subr.mxu0 0.0
    %931 = vmatpush1.msra.mxu0 0.0
    %932 = vmatprep.subr.mxu0 0.0
    %933 = vmatpush1.msra.mxu0 0.0
    %934 = vmatprep.subr.mxu0 0.0
    %935 = vmatpush1.msra.mxu0 0.0
    %936 = vmatprep.subr.mxu0 0.0
    %937 = vmatpush1.msra.mxu0 0.0
    %938 = vmatprep.subr.mxu0 0.0
    %939 = vmatpush1.msra.mxu0 0.0
    %940 = vmatprep.subr.mxu0 0.0
    %941 = vmatpush1.msra.mxu0 0.0
    %942 = vmatprep.subr.mxu0 0.0
    %943 = vmatpush1.msra.mxu0 0.0
    %944 = vmatprep.subr.mxu0 0.0
    %945 = vmatpush1.msra.mxu0 0.0
    %946 = vmatprep.subr.mxu0 0.0
    %947 = vmatpush1.msra.mxu0 0.0
    %948 = vmatprep.subr.mxu0 0.0
    %949 = vmatpush1.msra.mxu0 0.0
    %950 = vmatprep.subr.mxu0 0.0
    %951 = vmatpush1.msra.mxu0 0.0
    %952 = vmatprep.subr.mxu0 0.0
    %953 = vmatpush1.msra.mxu0 0.0
    %954 = vmatprep.subr.mxu0 0.0
    %955 = vmatpush1.msra.mxu0 0.0
    %956 = vmatprep.subr.mxu0 0.0
    %957 = vmatpush1.msra.mxu0 0.0
    %958 = vmatprep.subr.mxu0 %v326
    %959 = vmatpush1.msra.mxu0 %v324
    %960 = vmatprep.subr.mxu0 0.0
    %961 = vmatpush2.msra.mxu0 0.0
    %962 = vmatprep.subr.mxu0 0.0
    %963 = vmatpush2.msra.mxu0 0.0
    %964 = vmatprep.subr.mxu0 0.0
    %965 = vmatpush2.msra.mxu0 0.0
    %966 = vmatprep.subr.mxu0 0.0
    %967 = vmatpush2.msra.mxu0 0.0
    %968 = vmatprep.subr.mxu0 0.0
    %969 = vmatpush2.msra.mxu0 0.0
    %970 = vmatprep.subr.mxu0 0.0
    %971 = vmatpush2.msra.mxu0 0.0
    %972 = vmatprep.subr.mxu0 0.0
    %973 = vmatpush2.msra.mxu0 0.0
    %974 = vmatprep.subr.mxu0 0.0
    %975 = vmatpush2.msra.mxu0 0.0
    %976 = vmatprep.subr.mxu0 0.0
    %977 = vmatpush2.msra.mxu0 0.0
    %978 = vmatprep.subr.mxu0 0.0
    %979 = vmatpush2.msra.mxu0 0.0
    %980 = vmatprep.subr.mxu0 0.0
    %981 = vmatpush2.msra.mxu0 0.0
    %982 = vmatprep.subr.mxu0 0.0
    %983 = vmatpush2.msra.mxu0 0.0
    %984 = vmatprep.subr.mxu0 0.0
    %985 = vmatpush2.msra.mxu0 0.0
    %986 = vmatprep.subr.mxu0 0.0
    %987 = vmatpush2.msra.mxu0 0.0
    %988 = vmatprep.subr.mxu0 0.0
    %989 = vmatpush2.msra.mxu0 0.0
    %990 = vmatprep.subr.mxu0 0.0
    %991 = vmatpush2.msra.mxu0 0.0
    %992 = vmatprep.mubr.f32.mxu0 0.0
    %993 = vmatmul.mubr.f32.gmra.mxu0 %v923
    %v994 = vpop.f32.mrf.mxu0
    %v995 = vadd.f32 0.0, %v994
    %v996 = vpop.f32.mrf.mxu0
    %v997 = vadd.f32 0.0, %v996
    %998 = vmatprep.mubr.f32.mxu0 0.0
    %999 = vmatmul.mubr.f32.gmra.mxu0 %v926
    %v1000 = vpop.f32.mrf.mxu0
    %v1001 = vadd.f32 0.0, %v1000
    %v1002 = vpop.f32.mrf.mxu0
    %v1003 = vadd.f32 0.0, %v1002
    %1004 = vdwg.mxu0
    %v1005 = vadd.f32 %v915, %v995
    %v1006 = vadd.f32 %v916, %v997
    %v1007 = vadd.f32 %v917, %v1001
    %v1008 = vadd.f32 %v918, %v1003
    %s1009 = scalar_lea.vmem %s2, 32
    %v1010 = vld [vmem:[%s1009] sm:$0xff]
    %v1011 = vld [vmem:[%s1009 + $0x8] sm:$0xff]
    %v1013 = vsel %vm831, %v1010, 0
    %v1016 = vsel %vm831, %v1011, 0
    %1018 = vmatprep.subr.mxu0 0.0
    %1019 = vmatpush1.msra.mxu0 0.0
    %1020 = vmatprep.subr.mxu0 0.0
    %1021 = vmatpush1.msra.mxu0 0.0
    %1022 = vmatprep.subr.mxu0 0.0
    %1023 = vmatpush1.msra.mxu0 0.0
    %1024 = vmatprep.subr.mxu0 0.0
    %1025 = vmatpush1.msra.mxu0 0.0
    %1026 = vmatprep.subr.mxu0 0.0
    %1027 = vmatpush1.msra.mxu0 0.0
    %1028 = vmatprep.subr.mxu0 0.0
    %1029 = vmatpush1.msra.mxu0 0.0
    %1030 = vmatprep.subr.mxu0 0.0
    %1031 = vmatpush1.msra.mxu0 0.0
    %1032 = vmatprep.subr.mxu0 0.0
    %1033 = vmatpush1.msra.mxu0 0.0
    %1034 = vmatprep.subr.mxu0 0.0
    %1035 = vmatpush1.msra.mxu0 0.0
    %1036 = vmatprep.subr.mxu0 0.0
    %1037 = vmatpush1.msra.mxu0 0.0
    %1038 = vmatprep.subr.mxu0 0.0
    %1039 = vmatpush1.msra.mxu0 0.0
    %1040 = vmatprep.subr.mxu0 0.0
    %1041 = vmatpush1.msra.mxu0 0.0
    %1042 = vmatprep.subr.mxu0 0.0
    %1043 = vmatpush1.msra.mxu0 0.0
    %1044 = vmatprep.subr.mxu0 0.0
    %1045 = vmatpush1.msra.mxu0 0.0
    %1046 = vmatprep.subr.mxu0 0.0
    %1047 = vmatpush1.msra.mxu0 0.0
    %1048 = vmatprep.subr.mxu0 %v397
    %1049 = vmatpush1.msra.mxu0 %v395
    %1050 = vmatprep.subr.mxu0 0.0
    %1051 = vmatpush2.msra.mxu0 0.0
    %1052 = vmatprep.subr.mxu0 0.0
    %1053 = vmatpush2.msra.mxu0 0.0
    %1054 = vmatprep.subr.mxu0 0.0
    %1055 = vmatpush2.msra.mxu0 0.0
    %1056 = vmatprep.subr.mxu0 0.0
    %1057 = vmatpush2.msra.mxu0 0.0
    %1058 = vmatprep.subr.mxu0 0.0
    %1059 = vmatpush2.msra.mxu0 0.0
    %1060 = vmatprep.subr.mxu0 0.0
    %1061 = vmatpush2.msra.mxu0 0.0
    %1062 = vmatprep.subr.mxu0 0.0
    %1063 = vmatpush2.msra.mxu0 0.0
    %1064 = vmatprep.subr.mxu0 0.0
    %1065 = vmatpush2.msra.mxu0 0.0
    %1066 = vmatprep.subr.mxu0 0.0
    %1067 = vmatpush2.msra.mxu0 0.0
    %1068 = vmatprep.subr.mxu0 0.0
    %1069 = vmatpush2.msra.mxu0 0.0
    %1070 = vmatprep.subr.mxu0 0.0
    %1071 = vmatpush2.msra.mxu0 0.0
    %1072 = vmatprep.subr.mxu0 0.0
    %1073 = vmatpush2.msra.mxu0 0.0
    %1074 = vmatprep.subr.mxu0 0.0
    %1075 = vmatpush2.msra.mxu0 0.0
    %1076 = vmatprep.subr.mxu0 0.0
    %1077 = vmatpush2.msra.mxu0 0.0
    %1078 = vmatprep.subr.mxu0 0.0
    %1079 = vmatpush2.msra.mxu0 0.0
    %1080 = vmatprep.subr.mxu0 0.0
    %1081 = vmatpush2.msra.mxu0 0.0
    %1082 = vmatprep.mubr.f32.mxu0 0.0
    %1083 = vmatmul.mubr.f32.gmra.mxu0 %v1013
    %v1084 = vpop.f32.mrf.mxu0
    %v1085 = vadd.f32 0.0, %v1084
    %v1086 = vpop.f32.mrf.mxu0
    %v1087 = vadd.f32 0.0, %v1086
    %1088 = vmatprep.mubr.f32.mxu0 0.0
    %1089 = vmatmul.mubr.f32.gmra.mxu0 %v1016
    %v1090 = vpop.f32.mrf.mxu0
    %v1091 = vadd.f32 0.0, %v1090
    %v1092 = vpop.f32.mrf.mxu0
    %v1093 = vadd.f32 0.0, %v1092
    %1094 = vdwg.mxu0
    %v1095 = vadd.f32 %v1005, %v1085
    %v1096 = vadd.f32 %v1006, %v1087
    %v1097 = vadd.f32 %v1007, %v1091
    %v1098 = vadd.f32 %v1008, %v1093
    %s1099 = scalar_lea.vmem %s2, 48
    %v1100 = vld [vmem:[%s1099] sm:$0xff]
    %v1101 = vld [vmem:[%s1099 + $0x8] sm:$0xff]
    %v1103 = vsel %vm831, %v1100, 0
    %v1106 = vsel %vm831, %v1101, 0
    %1108 = vmatprep.subr.mxu0 0.0
    %1109 = vmatpush1.msra.mxu0 0.0
    %1110 = vmatprep.subr.mxu0 0.0
    %1111 = vmatpush1.msra.mxu0 0.0
    %1112 = vmatprep.subr.mxu0 0.0
    %1113 = vmatpush1.msra.mxu0 0.0
    %1114 = vmatprep.subr.mxu0 0.0
    %1115 = vmatpush1.msra.mxu0 0.0
    %1116 = vmatprep.subr.mxu0 0.0
    %1117 = vmatpush1.msra.mxu0 0.0
    %1118 = vmatprep.subr.mxu0 0.0
    %1119 = vmatpush1.msra.mxu0 0.0
    %1120 = vmatprep.subr.mxu0 0.0
    %1121 = vmatpush1.msra.mxu0 0.0
    %1122 = vmatprep.subr.mxu0 0.0
    %1123 = vmatpush1.msra.mxu0 0.0
    %1124 = vmatprep.subr.mxu0 0.0
    %1125 = vmatpush1.msra.mxu0 0.0
    %1126 = vmatprep.subr.mxu0 0.0
    %1127 = vmatpush1.msra.mxu0 0.0
    %1128 = vmatprep.subr.mxu0 0.0
    %1129 = vmatpush1.msra.mxu0 0.0
    %1130 = vmatprep.subr.mxu0 0.0
    %1131 = vmatpush1.msra.mxu0 0.0
    %1132 = vmatprep.subr.mxu0 0.0
    %1133 = vmatpush1.msra.mxu0 0.0
    %1134 = vmatprep.subr.mxu0 0.0
    %1135 = vmatpush1.msra.mxu0 0.0
    %1136 = vmatprep.subr.mxu0 0.0
    %1137 = vmatpush1.msra.mxu0 0.0
    %1138 = vmatprep.subr.mxu0 %v468
    %1139 = vmatpush1.msra.mxu0 %v466
    %1140 = vmatprep.subr.mxu0 0.0
    %1141 = vmatpush2.msra.mxu0 0.0
    %1142 = vmatprep.subr.mxu0 0.0
    %1143 = vmatpush2.msra.mxu0 0.0
    %1144 = vmatprep.subr.mxu0 0.0
    %1145 = vmatpush2.msra.mxu0 0.0
    %1146 = vmatprep.subr.mxu0 0.0
    %1147 = vmatpush2.msra.mxu0 0.0
    %1148 = vmatprep.subr.mxu0 0.0
    %1149 = vmatpush2.msra.mxu0 0.0
    %1150 = vmatprep.subr.mxu0 0.0
    %1151 = vmatpush2.msra.mxu0 0.0
    %1152 = vmatprep.subr.mxu0 0.0
    %1153 = vmatpush2.msra.mxu0 0.0
    %1154 = vmatprep.subr.mxu0 0.0
    %1155 = vmatpush2.msra.mxu0 0.0
    %1156 = vmatprep.subr.mxu0 0.0
    %1157 = vmatpush2.msra.mxu0 0.0
    %1158 = vmatprep.subr.mxu0 0.0
    %1159 = vmatpush2.msra.mxu0 0.0
    %1160 = vmatprep.subr.mxu0 0.0
    %1161 = vmatpush2.msra.mxu0 0.0
    %1162 = vmatprep.subr.mxu0 0.0
    %1163 = vmatpush2.msra.mxu0 0.0
    %1164 = vmatprep.subr.mxu0 0.0
    %1165 = vmatpush2.msra.mxu0 0.0
    %1166 = vmatprep.subr.mxu0 0.0
    %1167 = vmatpush2.msra.mxu0 0.0
    %1168 = vmatprep.subr.mxu0 0.0
    %1169 = vmatpush2.msra.mxu0 0.0
    %1170 = vmatprep.subr.mxu0 0.0
    %1171 = vmatpush2.msra.mxu0 0.0
    %1172 = vmatprep.mubr.f32.mxu0 0.0
    %1173 = vmatmul.mubr.f32.gmra.mxu0 %v1103
    %v1174 = vpop.f32.mrf.mxu0
    %v1175 = vadd.f32 0.0, %v1174
    %v1176 = vpop.f32.mrf.mxu0
    %v1177 = vadd.f32 0.0, %v1176
    %1178 = vmatprep.mubr.f32.mxu0 0.0
    %1179 = vmatmul.mubr.f32.gmra.mxu0 %v1106
    %v1180 = vpop.f32.mrf.mxu0
    %v1181 = vadd.f32 0.0, %v1180
    %v1182 = vpop.f32.mrf.mxu0
    %v1183 = vadd.f32 0.0, %v1182
    %1184 = vdwg.mxu0
    %v1185 = vadd.f32 %v1095, %v1175
    %v1186 = vadd.f32 %v1096, %v1177
    %v1187 = vadd.f32 %v1097, %v1181
    %v1188 = vadd.f32 %v1098, %v1183
    %s1189 = scalar_lea.vmem %s2, 64
    %v1190 = vld [vmem:[%s1189] sm:$0xff]
    %v1191 = vld [vmem:[%s1189 + $0x8] sm:$0xff]
    %v1193 = vsel %vm831, %v1190, 0
    %v1196 = vsel %vm831, %v1191, 0
    %1198 = vmatprep.subr.mxu0 0.0
    %1199 = vmatpush1.msra.mxu0 0.0
    %1200 = vmatprep.subr.mxu0 0.0
    %1201 = vmatpush1.msra.mxu0 0.0
    %1202 = vmatprep.subr.mxu0 0.0
    %1203 = vmatpush1.msra.mxu0 0.0
    %1204 = vmatprep.subr.mxu0 0.0
    %1205 = vmatpush1.msra.mxu0 0.0
    %1206 = vmatprep.subr.mxu0 0.0
    %1207 = vmatpush1.msra.mxu0 0.0
    %1208 = vmatprep.subr.mxu0 0.0
    %1209 = vmatpush1.msra.mxu0 0.0
    %1210 = vmatprep.subr.mxu0 0.0
    %1211 = vmatpush1.msra.mxu0 0.0
    %1212 = vmatprep.subr.mxu0 0.0
    %1213 = vmatpush1.msra.mxu0 0.0
    %1214 = vmatprep.subr.mxu0 0.0
    %1215 = vmatpush1.msra.mxu0 0.0
    %1216 = vmatprep.subr.mxu0 0.0
    %1217 = vmatpush1.msra.mxu0 0.0
    %1218 = vmatprep.subr.mxu0 0.0
    %1219 = vmatpush1.msra.mxu0 0.0
    %1220 = vmatprep.subr.mxu0 0.0
    %1221 = vmatpush1.msra.mxu0 0.0
    %1222 = vmatprep.subr.mxu0 0.0
    %1223 = vmatpush1.msra.mxu0 0.0
    %1224 = vmatprep.subr.mxu0 0.0
    %1225 = vmatpush1.msra.mxu0 0.0
    %1226 = vmatprep.subr.mxu0 0.0
    %1227 = vmatpush1.msra.mxu0 0.0
    %1228 = vmatprep.subr.mxu0 %v539
    %1229 = vmatpush1.msra.mxu0 %v537
    %1230 = vmatprep.subr.mxu0 0.0
    %1231 = vmatpush2.msra.mxu0 0.0
    %1232 = vmatprep.subr.mxu0 0.0
    %1233 = vmatpush2.msra.mxu0 0.0
    %1234 = vmatprep.subr.mxu0 0.0
    %1235 = vmatpush2.msra.mxu0 0.0
    %1236 = vmatprep.subr.mxu0 0.0
    %1237 = vmatpush2.msra.mxu0 0.0
    %1238 = vmatprep.subr.mxu0 0.0
    %1239 = vmatpush2.msra.mxu0 0.0
    %1240 = vmatprep.subr.mxu0 0.0
    %1241 = vmatpush2.msra.mxu0 0.0
    %1242 = vmatprep.subr.mxu0 0.0
    %1243 = vmatpush2.msra.mxu0 0.0
    %1244 = vmatprep.subr.mxu0 0.0
    %1245 = vmatpush2.msra.mxu0 0.0
    %1246 = vmatprep.subr.mxu0 0.0
    %1247 = vmatpush2.msra.mxu0 0.0
    %1248 = vmatprep.subr.mxu0 0.0
    %1249 = vmatpush2.msra.mxu0 0.0
    %1250 = vmatprep.subr.mxu0 0.0
    %1251 = vmatpush2.msra.mxu0 0.0
    %1252 = vmatprep.subr.mxu0 0.0
    %1253 = vmatpush2.msra.mxu0 0.0
    %1254 = vmatprep.subr.mxu0 0.0
    %1255 = vmatpush2.msra.mxu0 0.0
    %1256 = vmatprep.subr.mxu0 0.0
    %1257 = vmatpush2.msra.mxu0 0.0
    %1258 = vmatprep.subr.mxu0 0.0
    %1259 = vmatpush2.msra.mxu0 0.0
    %1260 = vmatprep.subr.mxu0 0.0
    %1261 = vmatpush2.msra.mxu0 0.0
    %1262 = vmatprep.mubr.f32.mxu0 0.0
    %1263 = vmatmul.mubr.f32.gmra.mxu0 %v1193
    %v1264 = vpop.f32.mrf.mxu0
    %v1265 = vadd.f32 0.0, %v1264
    %v1266 = vpop.f32.mrf.mxu0
    %v1267 = vadd.f32 0.0, %v1266
    %1268 = vmatprep.mubr.f32.mxu0 0.0
    %1269 = vmatmul.mubr.f32.gmra.mxu0 %v1196
    %v1270 = vpop.f32.mrf.mxu0
    %v1271 = vadd.f32 0.0, %v1270
    %v1272 = vpop.f32.mrf.mxu0
    %v1273 = vadd.f32 0.0, %v1272
    %1274 = vdwg.mxu0
    %v1275 = vadd.f32 %v1185, %v1265
    %v1276 = vadd.f32 %v1186, %v1267
    %v1277 = vadd.f32 %v1187, %v1271
    %v1278 = vadd.f32 %v1188, %v1273
    %s1279 = scalar_lea.vmem %s2, 80
    %v1280 = vld [vmem:[%s1279] sm:$0xff]
    %v1281 = vld [vmem:[%s1279 + $0x8] sm:$0xff]
    %v1283 = vsel %vm831, %v1280, 0
    %v1286 = vsel %vm831, %v1281, 0
    %1288 = vmatprep.subr.mxu0 0.0
    %1289 = vmatpush1.msra.mxu0 0.0
    %1290 = vmatprep.subr.mxu0 0.0
    %1291 = vmatpush1.msra.mxu0 0.0
    %1292 = vmatprep.subr.mxu0 0.0
    %1293 = vmatpush1.msra.mxu0 0.0
    %1294 = vmatprep.subr.mxu0 0.0
    %1295 = vmatpush1.msra.mxu0 0.0
    %1296 = vmatprep.subr.mxu0 0.0
    %1297 = vmatpush1.msra.mxu0 0.0
    %1298 = vmatprep.subr.mxu0 0.0
    %1299 = vmatpush1.msra.mxu0 0.0
    %1300 = vmatprep.subr.mxu0 0.0
    %1301 = vmatpush1.msra.mxu0 0.0
    %1302 = vmatprep.subr.mxu0 0.0
    %1303 = vmatpush1.msra.mxu0 0.0
    %1304 = vmatprep.subr.mxu0 0.0
    %1305 = vmatpush1.msra.mxu0 0.0
    %1306 = vmatprep.subr.mxu0 0.0
    %1307 = vmatpush1.msra.mxu0 0.0
    %1308 = vmatprep.subr.mxu0 0.0
    %1309 = vmatpush1.msra.mxu0 0.0
    %1310 = vmatprep.subr.mxu0 0.0
    %1311 = vmatpush1.msra.mxu0 0.0
    %1312 = vmatprep.subr.mxu0 0.0
    %1313 = vmatpush1.msra.mxu0 0.0
    %1314 = vmatprep.subr.mxu0 0.0
    %1315 = vmatpush1.msra.mxu0 0.0
    %1316 = vmatprep.subr.mxu0 0.0
    %1317 = vmatpush1.msra.mxu0 0.0
    %1318 = vmatprep.subr.mxu0 %v610
    %1319 = vmatpush1.msra.mxu0 %v608
    %1320 = vmatprep.subr.mxu0 0.0
    %1321 = vmatpush2.msra.mxu0 0.0
    %1322 = vmatprep.subr.mxu0 0.0
    %1323 = vmatpush2.msra.mxu0 0.0
    %1324 = vmatprep.subr.mxu0 0.0
    %1325 = vmatpush2.msra.mxu0 0.0
    %1326 = vmatprep.subr.mxu0 0.0
    %1327 = vmatpush2.msra.mxu0 0.0
    %1328 = vmatprep.subr.mxu0 0.0
    %1329 = vmatpush2.msra.mxu0 0.0
    %1330 = vmatprep.subr.mxu0 0.0
    %1331 = vmatpush2.msra.mxu0 0.0
    %1332 = vmatprep.subr.mxu0 0.0
    %1333 = vmatpush2.msra.mxu0 0.0
    %1334 = vmatprep.subr.mxu0 0.0
    %1335 = vmatpush2.msra.mxu0 0.0
    %1336 = vmatprep.subr.mxu0 0.0
    %1337 = vmatpush2.msra.mxu0 0.0
    %1338 = vmatprep.subr.mxu0 0.0
    %1339 = vmatpush2.msra.mxu0 0.0
    %1340 = vmatprep.subr.mxu0 0.0
    %1341 = vmatpush2.msra.mxu0 0.0
    %1342 = vmatprep.subr.mxu0 0.0
    %1343 = vmatpush2.msra.mxu0 0.0
    %1344 = vmatprep.subr.mxu0 0.0
    %1345 = vmatpush2.msra.mxu0 0.0
    %1346 = vmatprep.subr.mxu0 0.0
    %1347 = vmatpush2.msra.mxu0 0.0
    %1348 = vmatprep.subr.mxu0 0.0
    %1349 = vmatpush2.msra.mxu0 0.0
    %1350 = vmatprep.subr.mxu0 0.0
    %1351 = vmatpush2.msra.mxu0 0.0
    %1352 = vmatprep.mubr.f32.mxu0 0.0
    %1353 = vmatmul.mubr.f32.gmra.mxu0 %v1283
    %v1354 = vpop.f32.mrf.mxu0
    %v1355 = vadd.f32 0.0, %v1354
    %v1356 = vpop.f32.mrf.mxu0
    %v1357 = vadd.f32 0.0, %v1356
    %1358 = vmatprep.mubr.f32.mxu0 0.0
    %1359 = vmatmul.mubr.f32.gmra.mxu0 %v1286
    %v1360 = vpop.f32.mrf.mxu0
    %v1361 = vadd.f32 0.0, %v1360
    %v1362 = vpop.f32.mrf.mxu0
    %v1363 = vadd.f32 0.0, %v1362
    %1364 = vdwg.mxu0
    %v1365 = vadd.f32 %v1275, %v1355
    %v1366 = vadd.f32 %v1276, %v1357
    %v1367 = vadd.f32 %v1277, %v1361
    %v1368 = vadd.f32 %v1278, %v1363
    %s1369 = scalar_lea.vmem %s2, 96
    %v1370 = vld [vmem:[%s1369] sm:$0xff]
    %v1371 = vld [vmem:[%s1369 + $0x8] sm:$0xff]
    %v1373 = vsel %vm831, %v1370, 0
    %v1376 = vsel %vm831, %v1371, 0
    %1378 = vmatprep.subr.mxu0 0.0
    %1379 = vmatpush1.msra.mxu0 0.0
    %1380 = vmatprep.subr.mxu0 0.0
    %1381 = vmatpush1.msra.mxu0 0.0
    %1382 = vmatprep.subr.mxu0 0.0
    %1383 = vmatpush1.msra.mxu0 0.0
    %1384 = vmatprep.subr.mxu0 0.0
    %1385 = vmatpush1.msra.mxu0 0.0
    %1386 = vmatprep.subr.mxu0 0.0
    %1387 = vmatpush1.msra.mxu0 0.0
    %1388 = vmatprep.subr.mxu0 0.0
    %1389 = vmatpush1.msra.mxu0 0.0
    %1390 = vmatprep.subr.mxu0 0.0
    %1391 = vmatpush1.msra.mxu0 0.0
    %1392 = vmatprep.subr.mxu0 0.0
    %1393 = vmatpush1.msra.mxu0 0.0
    %1394 = vmatprep.subr.mxu0 0.0
    %1395 = vmatpush1.msra.mxu0 0.0
    %1396 = vmatprep.subr.mxu0 0.0
    %1397 = vmatpush1.msra.mxu0 0.0
    %1398 = vmatprep.subr.mxu0 0.0
    %1399 = vmatpush1.msra.mxu0 0.0
    %1400 = vmatprep.subr.mxu0 0.0
    %1401 = vmatpush1.msra.mxu0 0.0
    %1402 = vmatprep.subr.mxu0 0.0
    %1403 = vmatpush1.msra.mxu0 0.0
    %1404 = vmatprep.subr.mxu0 0.0
    %1405 = vmatpush1.msra.mxu0 0.0
    %1406 = vmatprep.subr.mxu0 0.0
    %1407 = vmatpush1.msra.mxu0 0.0
    %1408 = vmatprep.subr.mxu0 %v681
    %1409 = vmatpush1.msra.mxu0 %v679
    %1410 = vmatprep.subr.mxu0 0.0
    %1411 = vmatpush2.msra.mxu0 0.0
    %1412 = vmatprep.subr.mxu0 0.0
    %1413 = vmatpush2.msra.mxu0 0.0
    %1414 = vmatprep.subr.mxu0 0.0
    %1415 = vmatpush2.msra.mxu0 0.0
    %1416 = vmatprep.subr.mxu0 0.0
    %1417 = vmatpush2.msra.mxu0 0.0
    %1418 = vmatprep.subr.mxu0 0.0
    %1419 = vmatpush2.msra.mxu0 0.0
    %1420 = vmatprep.subr.mxu0 0.0
    %1421 = vmatpush2.msra.mxu0 0.0
    %1422 = vmatprep.subr.mxu0 0.0
    %1423 = vmatpush2.msra.mxu0 0.0
    %1424 = vmatprep.subr.mxu0 0.0
    %1425 = vmatpush2.msra.mxu0 0.0
    %1426 = vmatprep.subr.mxu0 0.0
    %1427 = vmatpush2.msra.mxu0 0.0
    %1428 = vmatprep.subr.mxu0 0.0
    %1429 = vmatpush2.msra.mxu0 0.0
    %1430 = vmatprep.subr.mxu0 0.0
    %1431 = vmatpush2.msra.mxu0 0.0
    %1432 = vmatprep.subr.mxu0 0.0
    %1433 = vmatpush2.msra.mxu0 0.0
    %1434 = vmatprep.subr.mxu0 0.0
    %1435 = vmatpush2.msra.mxu0 0.0
    %1436 = vmatprep.subr.mxu0 0.0
    %1437 = vmatpush2.msra.mxu0 0.0
    %1438 = vmatprep.subr.mxu0 0.0
    %1439 = vmatpush2.msra.mxu0 0.0
    %1440 = vmatprep.subr.mxu0 0.0
    %1441 = vmatpush2.msra.mxu0 0.0
    %1442 = vmatprep.mubr.f32.mxu0 0.0
    %1443 = vmatmul.mubr.f32.gmra.mxu0 %v1373
    %v1444 = vpop.f32.mrf.mxu0
    %v1445 = vadd.f32 0.0, %v1444
    %v1446 = vpop.f32.mrf.mxu0
    %v1447 = vadd.f32 0.0, %v1446
    %1448 = vmatprep.mubr.f32.mxu0 0.0
    %1449 = vmatmul.mubr.f32.gmra.mxu0 %v1376
    %v1450 = vpop.f32.mrf.mxu0
    %v1451 = vadd.f32 0.0, %v1450
    %v1452 = vpop.f32.mrf.mxu0
    %v1453 = vadd.f32 0.0, %v1452
    %1454 = vdwg.mxu0
    %v1455 = vadd.f32 %v1365, %v1445
    %v1456 = vadd.f32 %v1366, %v1447
    %v1457 = vadd.f32 %v1367, %v1451
    %v1458 = vadd.f32 %v1368, %v1453
    %s1459 = scalar_lea.vmem %s2, 112
    %v1460 = vld [vmem:[%s1459] sm:$0xff]
    %v1461 = vld [vmem:[%s1459 + $0x8] sm:$0xff]
    %v1463 = vsel %vm831, %v1460, 0
    %v1466 = vsel %vm831, %v1461, 0
    %1468 = vmatprep.subr.mxu0 0.0
    %1469 = vmatpush1.msra.mxu0 0.0
    %1470 = vmatprep.subr.mxu0 0.0
    %1471 = vmatpush1.msra.mxu0 0.0
    %1472 = vmatprep.subr.mxu0 0.0
    %1473 = vmatpush1.msra.mxu0 0.0
    %1474 = vmatprep.subr.mxu0 0.0
    %1475 = vmatpush1.msra.mxu0 0.0
    %1476 = vmatprep.subr.mxu0 0.0
    %1477 = vmatpush1.msra.mxu0 0.0
    %1478 = vmatprep.subr.mxu0 0.0
    %1479 = vmatpush1.msra.mxu0 0.0
    %1480 = vmatprep.subr.mxu0 0.0
    %1481 = vmatpush1.msra.mxu0 0.0
    %1482 = vmatprep.subr.mxu0 0.0
    %1483 = vmatpush1.msra.mxu0 0.0
    %1484 = vmatprep.subr.mxu0 0.0
    %1485 = vmatpush1.msra.mxu0 0.0
    %1486 = vmatprep.subr.mxu0 0.0
    %1487 = vmatpush1.msra.mxu0 0.0
    %1488 = vmatprep.subr.mxu0 0.0
    %1489 = vmatpush1.msra.mxu0 0.0
    %1490 = vmatprep.subr.mxu0 0.0
    %1491 = vmatpush1.msra.mxu0 0.0
    %1492 = vmatprep.subr.mxu0 0.0
    %1493 = vmatpush1.msra.mxu0 0.0
    %1494 = vmatprep.subr.mxu0 0.0
    %1495 = vmatpush1.msra.mxu0 0.0
    %1496 = vmatprep.subr.mxu0 0.0
    %1497 = vmatpush1.msra.mxu0 0.0
    %1498 = vmatprep.subr.mxu0 %v752
    %1499 = vmatpush1.msra.mxu0 %v750
    %1500 = vmatprep.subr.mxu0 0.0
    %1501 = vmatpush2.msra.mxu0 0.0
    %1502 = vmatprep.subr.mxu0 0.0
    %1503 = vmatpush2.msra.mxu0 0.0
    %1504 = vmatprep.subr.mxu0 0.0
    %1505 = vmatpush2.msra.mxu0 0.0
    %1506 = vmatprep.subr.mxu0 0.0
    %1507 = vmatpush2.msra.mxu0 0.0
    %1508 = vmatprep.subr.mxu0 0.0
    %1509 = vmatpush2.msra.mxu0 0.0
    %1510 = vmatprep.subr.mxu0 0.0
    %1511 = vmatpush2.msra.mxu0 0.0
    %1512 = vmatprep.subr.mxu0 0.0
    %1513 = vmatpush2.msra.mxu0 0.0
    %1514 = vmatprep.subr.mxu0 0.0
    %1515 = vmatpush2.msra.mxu0 0.0
    %1516 = vmatprep.subr.mxu0 0.0
    %1517 = vmatpush2.msra.mxu0 0.0
    %1518 = vmatprep.subr.mxu0 0.0
    %1519 = vmatpush2.msra.mxu0 0.0
    %1520 = vmatprep.subr.mxu0 0.0
    %1521 = vmatpush2.msra.mxu0 0.0
    %1522 = vmatprep.subr.mxu0 0.0
    %1523 = vmatpush2.msra.mxu0 0.0
    %1524 = vmatprep.subr.mxu0 0.0
    %1525 = vmatpush2.msra.mxu0 0.0
    %1526 = vmatprep.subr.mxu0 0.0
    %1527 = vmatpush2.msra.mxu0 0.0
    %1528 = vmatprep.subr.mxu0 0.0
    %1529 = vmatpush2.msra.mxu0 0.0
    %1530 = vmatprep.subr.mxu0 0.0
    %1531 = vmatpush2.msra.mxu0 0.0
    %1532 = vmatprep.mubr.f32.mxu0 0.0
    %1533 = vmatmul.mubr.f32.gmra.mxu0 %v1463
    %v1534 = vpop.f32.mrf.mxu0
    %v1535 = vadd.f32 0.0, %v1534
    %v1536 = vpop.f32.mrf.mxu0
    %v1537 = vadd.f32 0.0, %v1536
    %1538 = vmatprep.mubr.f32.mxu0 0.0
    %1539 = vmatmul.mubr.f32.gmra.mxu0 %v1466
    %v1540 = vpop.f32.mrf.mxu0
    %v1541 = vadd.f32 0.0, %v1540
    %v1542 = vpop.f32.mrf.mxu0
    %v1543 = vadd.f32 0.0, %v1542
    %1544 = vdwg.mxu0
    %v1545 = vadd.f32 %v1455, %v1535
    %v1546 = vadd.f32 %v1456, %v1537
    %v1547 = vadd.f32 %v1457, %v1541
    %v1548 = vadd.f32 %v1458, %v1543
    %s1549 = scalar_lea.vmem %s2, 128
    %v1550 = vld [vmem:[%s1549] sm:$0xff]
    %v1551 = vld [vmem:[%s1549 + $0x8] sm:$0xff]
    %v1553 = vsel %vm831, %v1550, 0
    %v1556 = vsel %vm831, %v1551, 0
    %1558 = vmatprep.subr.mxu0 0.0
    %1559 = vmatpush1.msra.mxu0 0.0
    %1560 = vmatprep.subr.mxu0 0.0
    %1561 = vmatpush1.msra.mxu0 0.0
    %1562 = vmatprep.subr.mxu0 0.0
    %1563 = vmatpush1.msra.mxu0 0.0
    %1564 = vmatprep.subr.mxu0 0.0
    %1565 = vmatpush1.msra.mxu0 0.0
    %1566 = vmatprep.subr.mxu0 0.0
    %1567 = vmatpush1.msra.mxu0 0.0
    %1568 = vmatprep.subr.mxu0 0.0
    %1569 = vmatpush1.msra.mxu0 0.0
    %1570 = vmatprep.subr.mxu0 0.0
    %1571 = vmatpush1.msra.mxu0 0.0
    %1572 = vmatprep.subr.mxu0 0.0
    %1573 = vmatpush1.msra.mxu0 0.0
    %1574 = vmatprep.subr.mxu0 0.0
    %1575 = vmatpush1.msra.mxu0 0.0
    %1576 = vmatprep.subr.mxu0 0.0
    %1577 = vmatpush1.msra.mxu0 0.0
    %1578 = vmatprep.subr.mxu0 0.0
    %1579 = vmatpush1.msra.mxu0 0.0
    %1580 = vmatprep.subr.mxu0 0.0
    %1581 = vmatpush1.msra.mxu0 0.0
    %1582 = vmatprep.subr.mxu0 0.0
    %1583 = vmatpush1.msra.mxu0 0.0
    %1584 = vmatprep.subr.mxu0 0.0
    %1585 = vmatpush1.msra.mxu0 0.0
    %1586 = vmatprep.subr.mxu0 0.0
    %1587 = vmatpush1.msra.mxu0 0.0
    %1588 = vmatprep.subr.mxu0 %v823
    %1589 = vmatpush1.msra.mxu0 %v821
    %1590 = vmatprep.subr.mxu0 0.0
    %1591 = vmatpush2.msra.mxu0 0.0
    %1592 = vmatprep.subr.mxu0 0.0
    %1593 = vmatpush2.msra.mxu0 0.0
    %1594 = vmatprep.subr.mxu0 0.0
    %1595 = vmatpush2.msra.mxu0 0.0
    %1596 = vmatprep.subr.mxu0 0.0
    %1597 = vmatpush2.msra.mxu0 0.0
    %1598 = vmatprep.subr.mxu0 0.0
    %1599 = vmatpush2.msra.mxu0 0.0
    %1600 = vmatprep.subr.mxu0 0.0
    %1601 = vmatpush2.msra.mxu0 0.0
    %1602 = vmatprep.subr.mxu0 0.0
    %1603 = vmatpush2.msra.mxu0 0.0
    %1604 = vmatprep.subr.mxu0 0.0
    %1605 = vmatpush2.msra.mxu0 0.0
    %1606 = vmatprep.subr.mxu0 0.0
    %1607 = vmatpush2.msra.mxu0 0.0
    %1608 = vmatprep.subr.mxu0 0.0
    %1609 = vmatpush2.msra.mxu0 0.0
    %1610 = vmatprep.subr.mxu0 0.0
    %1611 = vmatpush2.msra.mxu0 0.0
    %1612 = vmatprep.subr.mxu0 0.0
    %1613 = vmatpush2.msra.mxu0 0.0
    %1614 = vmatprep.subr.mxu0 0.0
    %1615 = vmatpush2.msra.mxu0 0.0
    %1616 = vmatprep.subr.mxu0 0.0
    %1617 = vmatpush2.msra.mxu0 0.0
    %1618 = vmatprep.subr.mxu0 0.0
    %1619 = vmatpush2.msra.mxu0 0.0
    %1620 = vmatprep.subr.mxu0 0.0
    %1621 = vmatpush2.msra.mxu0 0.0
    %1622 = vmatprep.mubr.f32.mxu0 0.0
    %1623 = vmatmul.mubr.f32.gmra.mxu0 %v1553
    %v1624 = vpop.f32.mrf.mxu0
    %v1625 = vadd.f32 0.0, %v1624
    %v1626 = vpop.f32.mrf.mxu0
    %v1627 = vadd.f32 0.0, %v1626
    %1628 = vmatprep.mubr.f32.mxu0 0.0
    %1629 = vmatmul.mubr.f32.gmra.mxu0 %v1556
    %v1630 = vpop.f32.mrf.mxu0
    %v1631 = vadd.f32 0.0, %v1630
    %v1632 = vpop.f32.mrf.mxu0
    %v1633 = vadd.f32 0.0, %v1632
    %1634 = vdwg.mxu0
    %v1635 = vadd.f32 %v1545, %v1625
    %v1636 = vadd.f32 %v1546, %v1627
    %v1637 = vadd.f32 %v1547, %v1631
    %v1638 = vadd.f32 %v1548, %v1633
    %vm1639 = vcmp.ge.f32.partialorder %v1635, 0.0
    %vm1640 = vcmp.ge.f32.partialorder %v1636, 0.0
    %vm1641 = vcmp.ge.f32.partialorder %v1637, 0.0
    %vm1642 = vcmp.ge.f32.partialorder %v1638, 0.0
    %v1643 = vmul.f32 %v1635, 0.2
    %v1644 = vmul.f32 %v1636, 0.2
    %v1645 = vmul.f32 %v1637, 0.2
    %v1646 = vmul.f32 %v1638, 0.2
    %v1647 = vsel %vm1639, %v1635, %v1643
    %v1648 = vsel %vm1640, %v1636, %v1644
    %v1649 = vsel %vm1641, %v1637, %v1645
    %v1650 = vsel %vm1642, %v1638, %v1646
    %v1651 = vld [vmem:[%s4] sm:$0xff]
    %v1652 = vld [vmem:[%s4 + $0x8] sm:$0xff]
    %v1653 = vld [vmem:[%s5] sm:$0xff]
    %v1654 = vld [vmem:[%s5 + $0x8] sm:$0xff]
    %1656 = vset.pattern.permute.xlu0 0
    %1657 = vperm.xlu0 %1656, %v1653
    %v1658 = vpop.permute.xlu0 %1657
    %1661 = vset.pattern.permute.xlu0 0
    %1662 = vperm.xlu0 %1661, %v1654
    %v1663 = vpop.permute.xlu0 %1662
    %v1666 = vsel %vm831, %v1651, 0
    %v1669 = vsel %vm831, %v1652, 0
    %1671 = vmatprep.subr.mxu0 0.0
    %1672 = vmatpush1.msra.mxu0 0.0
    %1673 = vmatprep.subr.mxu0 0.0
    %1674 = vmatpush1.msra.mxu0 0.0
    %1675 = vmatprep.subr.mxu0 0.0
    %1676 = vmatpush1.msra.mxu0 0.0
    %1677 = vmatprep.subr.mxu0 0.0
    %1678 = vmatpush1.msra.mxu0 0.0
    %1679 = vmatprep.subr.mxu0 0.0
    %1680 = vmatpush1.msra.mxu0 0.0
    %1681 = vmatprep.subr.mxu0 0.0
    %1682 = vmatpush1.msra.mxu0 0.0
    %1683 = vmatprep.subr.mxu0 0.0
    %1684 = vmatpush1.msra.mxu0 0.0
    %1685 = vmatprep.subr.mxu0 0.0
    %1686 = vmatpush1.msra.mxu0 0.0
    %1687 = vmatprep.subr.mxu0 0.0
    %1688 = vmatpush1.msra.mxu0 0.0
    %1689 = vmatprep.subr.mxu0 0.0
    %1690 = vmatpush1.msra.mxu0 0.0
    %1691 = vmatprep.subr.mxu0 0.0
    %1692 = vmatpush1.msra.mxu0 0.0
    %1693 = vmatprep.subr.mxu0 0.0
    %1694 = vmatpush1.msra.mxu0 0.0
    %1695 = vmatprep.subr.mxu0 0.0
    %1696 = vmatpush1.msra.mxu0 0.0
    %1697 = vmatprep.subr.mxu0 0.0
    %1698 = vmatpush1.msra.mxu0 0.0
    %1699 = vmatprep.subr.mxu0 0.0
    %1700 = vmatpush1.msra.mxu0 0.0
    %1701 = vmatprep.subr.mxu0 %v539
    %1702 = vmatpush1.msra.mxu0 %v537
    %1703 = vmatprep.subr.mxu0 0.0
    %1704 = vmatpush2.msra.mxu0 0.0
    %1705 = vmatprep.subr.mxu0 0.0
    %1706 = vmatpush2.msra.mxu0 0.0
    %1707 = vmatprep.subr.mxu0 0.0
    %1708 = vmatpush2.msra.mxu0 0.0
    %1709 = vmatprep.subr.mxu0 0.0
    %1710 = vmatpush2.msra.mxu0 0.0
    %1711 = vmatprep.subr.mxu0 0.0
    %1712 = vmatpush2.msra.mxu0 0.0
    %1713 = vmatprep.subr.mxu0 0.0
    %1714 = vmatpush2.msra.mxu0 0.0
    %1715 = vmatprep.subr.mxu0 0.0
    %1716 = vmatpush2.msra.mxu0 0.0
    %1717 = vmatprep.subr.mxu0 0.0
    %1718 = vmatpush2.msra.mxu0 0.0
    %1719 = vmatprep.subr.mxu0 0.0
    %1720 = vmatpush2.msra.mxu0 0.0
    %1721 = vmatprep.subr.mxu0 0.0
    %1722 = vmatpush2.msra.mxu0 0.0
    %1723 = vmatprep.subr.mxu0 0.0
    %1724 = vmatpush2.msra.mxu0 0.0
    %1725 = vmatprep.subr.mxu0 0.0
    %1726 = vmatpush2.msra.mxu0 0.0
    %1727 = vmatprep.subr.mxu0 0.0
    %1728 = vmatpush2.msra.mxu0 0.0
    %1729 = vmatprep.subr.mxu0 0.0
    %1730 = vmatpush2.msra.mxu0 0.0
    %1731 = vmatprep.subr.mxu0 0.0
    %1732 = vmatpush2.msra.mxu0 0.0
    %1733 = vmatprep.subr.mxu0 0.0
    %1734 = vmatpush2.msra.mxu0 0.0
    %1735 = vmatprep.mubr.f32.mxu0 0.0
    %1736 = vmatmul.mubr.f32.gmra.mxu0 %v1666
    %v1737 = vpop.f32.mrf.mxu0
    %v1738 = vadd.f32 %v1658, %v1737
    %v1739 = vpop.f32.mrf.mxu0
    %v1740 = vadd.f32 %v1658, %v1739
    %1741 = vmatprep.mubr.f32.mxu0 0.0
    %1742 = vmatmul.mubr.f32.gmra.mxu0 %v1669
    %v1743 = vpop.f32.mrf.mxu0
    %v1744 = vadd.f32 %v1663, %v1743
    %v1745 = vpop.f32.mrf.mxu0
    %v1746 = vadd.f32 %v1663, %v1745
    %1747 = vdwg.mxu0
    %v1748 = vadd.f32 %v1647, %v1738
    %v1749 = vadd.f32 %v1648, %v1740
    %v1750 = vadd.f32 %v1649, %v1744
    %v1751 = vadd.f32 %v1650, %v1746
    %1752 = vst [vmem:[%s6] sm:$0xff] %v1748
    %1753 = vst [vmem:[%s6 + $0x8] sm:$0xff] %v1749
    %1754 = vst [vmem:[%s6 + $0x10] sm:$0xff] %v1750
    %1755 = vst [vmem:[%s6 + $0x18] sm:$0xff] %v1751
    // Predicated region
    $region30: #{upconv_block_pallas.1} parent=1 // pred_check
      _
    $region31: #{upconv_block_pallas.1} parent=1 // pred_check_branch
      %1757 = sbr.rel (0) target = $region33
    $region32: #{upconv_block_pallas.1} parent=1 // pred_region
      _
    $region33: #{upconv_block_pallas.1} parent=1 // pred_fallthru
      _
    // Predicated region
    $region34: #{upconv_block_pallas.1} parent=1 // pred_check
      _
    $region35: #{upconv_block_pallas.1} parent=1 // pred_check_branch
      %1759 = sbr.rel (0) target = $region37
    $region36: #{upconv_block_pallas.1} parent=1 // pred_region
      _
    $region37: #{upconv_block_pallas.1} parent=1 // pred_fallthru
      _
    %1760 = vsyncpa [#allocation3], 1

</llo_original>
